<compile_context>
chip_gen: v7x
topology: tpu7x:2x2x1
jax: 0.10.0
libtpu: 0.0.40
codegen_flags: <defaults>
</compile_context>

<pallas_src>
import jax
import jax.numpy as jnp
from jax.experimental import pallas as pl
from jax.experimental.pallas import tpu as pltpu


TARGET_TILE_BYTES = 8 * 1024 * 1024          # ~8 MiB tiles (review: 6-8 MiB)
MAX_TILE_BYTES = 10 * 1024 * 1024            # keep 2*(in+out) buffers <= ~40 MiB
DEFAULT_FUSE_BELOW_BYTES = 4 * 1024 * 1024   # small tensors -> fused XLA multiply
_LANE_WIDTHS = (512, 256, 128)               # lane-dense widths (multiples of 128)


def _scalar_mul_kernel(w_ref, x_ref, o_ref):
    # w_ref: (1,) f32 in SMEM; x_ref / o_ref: (tile_rows, W) VMEM tiles.
    w = w_ref[0]                                          # single sld, splat once
    o_ref[...] = (x_ref[...] * w).astype(o_ref.dtype)    # f32 compute, cast on store


def scalar_forward(x, weight, *,
                   fuse_below_bytes=DEFAULT_FUSE_BELOW_BYTES,
                   target_tile_bytes=TARGET_TILE_BYTES):
    """Scalar.forward: y = x * weight (single scalar broadcast over all of x).

    x: any-rank array (e.g. NCHW). weight: shape (1,) or () learned scalar.
    fuse_below_bytes: tensors smaller than this take the plain `x * w` path so
      XLA can fuse the multiply into neighboring ops.
    target_tile_bytes: per-tile byte target for the streaming kernel.
    """
    # TODO(synk): only the initializer==1 (true scalar) case is implemented; a
    # per-element weight (initializer > 1) would need a VMEM vector operand.
    assert weight.size == 1, "Scalar kernel expects a single learned scalar"

    orig_shape = x.shape
    out_dtype = jnp.result_type(x.dtype, weight.dtype)   # torch promotion rules
    w_scalar = weight.reshape(())

    total = x.size
    in_item = jnp.dtype(x.dtype).itemsize
    out_item = jnp.dtype(out_dtype).itemsize
    nbytes = total * in_item

    # ---- Small / fusable tensors: plain XLA multiply (fastest option) ------
    if total == 0 or nbytes < fuse_below_bytes:
        return (x * w_scalar).astype(out_dtype)

    # ---- Pick a lane-dense width that divides x.size exactly (no padding) --
    width = None
    for w_cand in _LANE_WIDTHS:
        if total % w_cand == 0:
            width = w_cand
            break
    if width is None:
        # Not a multiple of 128: a pad + slice would add ~2 extra HBM passes,
        # which dwarfs any in-kernel gain -> take the fused-XLA path instead.
        return (x * w_scalar).astype(out_dtype)

    rows = total // width
    x2d = x.reshape(rows, width)              # contiguous reshape: free, no copy

    # ---- Row-tile size: ~target_tile_bytes per tile, multiple of 8 sublanes -
    max_item = max(in_item, out_item)         # size tile by the larger of in/out
    tile_bytes = min(int(target_tile_bytes), MAX_TILE_BYTES)
    tr_target = max(8, (tile_bytes // (width * max_item)) // 8 * 8)
    if rows <= tr_target:
        tile_rows = rows                      # single full-extent block
        num_blocks = 1
    else:
        tile_rows = tr_target                 # multiple of 8
        # NOTE: a ragged last block relies on Pallas masking OOB writes; the
        # overhanging input rows are undefined but their outputs are dropped.
        num_blocks = pl.cdiv(rows, tile_rows)

    # ---- Explicit VMEM budget: 2x input + 2x output buffers + headroom -----
    tile_in_bytes = tile_rows * width * in_item
    tile_out_bytes = tile_rows * width * out_item
    vmem_needed = 2 * (tile_in_bytes + tile_out_bytes)
    vmem_limit = int(min(max(vmem_needed + (4 << 20), 32 << 20), 48 << 20))

    # Learned scalar stays in SMEM as f32 (matches torch's f32 weight).
    w_smem = weight.astype(jnp.float32).reshape((1,))

    out2d = pl.pallas_call(
        _scalar_mul_kernel,
        out_shape=jax.ShapeDtypeStruct((rows, width), out_dtype),
        grid_spec=pltpu.PrefetchScalarGridSpec(
            num_scalar_prefetch=0,
            grid=(num_blocks,),
            in_specs=[
                # Tiny (1,) f32 operand pinned in SMEM (single cheap copy).
                pl.BlockSpec(memory_space=pltpu.MemorySpace.SMEM),
                pl.BlockSpec((tile_rows, width), lambda i: (i, 0)),
            ],
            out_specs=pl.BlockSpec((tile_rows, width), lambda i: (i, 0)),
        ),
        compiler_params=pltpu.CompilerParams(
            # Row tiles are independent -> eligible for v7x dual-TC sharding.
            dimension_semantics=("parallel",),
            vmem_limit_bytes=vmem_limit,
        ),
    )(w_smem, x2d)

    return out2d.reshape(orig_shape)          # contiguous reshape: free, no copy


def make_scalar_params(key, scale=1.0, initializer=1, dtype=jnp.float32):
    """Stand-in for torch.rand(int(initializer)) * scale."""
    n = int(initializer)
    return jax.random.uniform(key, (n,), dtype=dtype) * scale


if __name__ == "__main__":
    key = jax.random.PRNGKey(0)
    k_w, k1, k2, k3, k4 = jax.random.split(key, 5)

    # Module config: Scalar(name="s", scale=1, trainable=True, initializer=1)
    weight = make_scalar_params(k_w, scale=1.0, initializer=1)

    # --- Test 1: small NCHW input -> default routes to fused-XLA fallback ---
    x1 = jax.random.normal(k1, (2, 4, 16, 16), dtype=jnp.float32)
    y1 = jax.block_until_ready(scalar_forward(x1, weight))
    y1_ref = x1 * weight[0]
    assert y1.shape == x1.shape and y1.dtype == y1_ref.dtype
    assert jnp.allclose(y1, y1_ref, atol=1e-6, rtol=1e-6)

    # --- Test 2: Pallas path, non-128 last dim but 512-divisible total ------
    # (4,8,128,130) -> 532480 elements = 1040 * 512: free reshape, no padding.
    x2 = jax.random.normal(k2, (4, 8, 128, 130), dtype=jnp.float32)
    y2 = jax.block_until_ready(scalar_forward(x2, weight, fuse_below_bytes=0))
    y2_ref = x2 * weight[0]
    assert y2.shape == x2.shape and y2.dtype == y2_ref.dtype
    assert jnp.allclose(y2, y2_ref, atol=1e-6, rtol=1e-6)

    # --- Test 3: multi-block grid path (small tile override keeps it small) -
    x3 = jax.random.normal(k3, (2, 8, 256, 256), dtype=jnp.float32)
    y3 = jax.block_until_ready(
        scalar_forward(x3, weight, fuse_below_bytes=0, target_tile_bytes=1 << 20))
    assert jnp.allclose(y3, x3 * weight[0], atol=1e-6, rtol=1e-6)

    # --- Test 4: bf16 input, f32 weight -> f32 output (torch promotion) -----
    x4 = jax.random.normal(k4, (4, 8, 128, 128), dtype=jnp.bfloat16)
    y4 = jax.block_until_ready(scalar_forward(x4, weight, fuse_below_bytes=0))
    y4_ref = x4.astype(jnp.float32) * weight[0]
    assert y4.dtype == jnp.float32
    assert jnp.allclose(y4, y4_ref, atol=1e-5, rtol=1e-5)

    print("KERNEL_OK")
</pallas_src>

<mosaic_0001>
module attributes {stable_mosaic.version = 11 : i64} {
  func.func @_scalar_mul_kernel(%arg0: i32, %arg1: memref<1xf32, #tpu.memory_space<smem>>, %arg2: memref<1040x512xf32, #tpu.memory_space<vmem>>, %arg3: memref<1040x512xf32, #tpu.memory_space<vmem>>) attributes {dimension_semantics = [#tpu.dimension_semantics<parallel>], iteration_bounds = array<i64: 1>, scalar_prefetch = 0 : i64, scratch_operands = 0 : i64, tpu.core_type = #tpu.core_type<tc>, window_params = [{transform_indices = @transform_0, window_bounds = array<i64: 1>}, {transform_indices = @transform_1, window_bounds = array<i64: 1040, 512>}, {transform_indices = @transform_2, window_bounds = array<i64: 1040, 512>}]} {
    %c0 = arith.constant 0 : index
    %0 = memref.load %arg1[%c0] : memref<1xf32, #tpu.memory_space<smem>>
    %c0_0 = arith.constant 0 : index
    %c0_1 = arith.constant 0 : index
    %1 = vector.load %arg2[%c0_0, %c0_1] : memref<1040x512xf32, #tpu.memory_space<vmem>>, vector<1040x512xf32>
    %2 = vector.broadcast %0 : f32 to vector<1040x512xf32>
    %3 = arith.mulf %1, %2 : vector<1040x512xf32>
    %c0_2 = arith.constant 0 : index
    %c0_3 = arith.constant 0 : index
    %4 = vector.load %arg3[%c0_2, %c0_3] : memref<1040x512xf32, #tpu.memory_space<vmem>>, vector<1040x512xf32>
    tpu.vector_store %arg3[%c0_2, %c0_3], %3 {strides = array<i32>} : memref<1040x512xf32, #tpu.memory_space<vmem>>, vector<1040x512xf32>,
    return
  }
  func.func @transform_0(%arg0: i32) -> i32 {
    %c0_i32 = arith.constant 0 : i32
    %c0_i32_0 = arith.constant 0 : i32
    return %c0_i32 : i32
  }
  func.func @transform_1(%arg0: i32) -> (i32, i32) {
    %c0_i32 = arith.constant 0 : i32
    %c0_i32_0 = arith.constant 0 : i32
    return %arg0, %c0_i32 : i32, i32
  }
  func.func @transform_2(%arg0: i32) -> (i32, i32) {
    %c0_i32 = arith.constant 0 : i32
    %c0_i32_0 = arith.constant 0 : i32
    return %arg0, %c0_i32 : i32, i32
  }
}

</mosaic_0001>

<llo_original>
// kernel: tpu_custom_call.1
$region0: #{tpu_custom_call.1}
  #allocation0 [shape = 'u32[]', space=smem, size = 0x4, offset = 0x4, fixed_abs, tag = 'smem constant byte address 0x4 - core index']
  #allocation1 [shape = 'u32[144,128]{1,0:T(1,128)}', space=vmem, size = 0x12000, scoped, tag = 'internal scratch']
  #allocation2 [shape = 'f32[1]{0:T(128)S(6)}', space=smem, size = 0x200, scoped, tag = 'scoped memory for tpu_custom_call.1']
  %s0 = inlined_call_operand.<no memory space> [shape: f32[1], index: 0, kind: input, shape index: {}]
  %s1 = inlined_call_operand.hbm [shape: f32[1040,512], index: 1, kind: input, shape index: {}]
  %s2 = inlined_call_operand.hbm [shape: f32[1040,512], index: 2, kind: output, shape index: {}]
  %s3 = sld [smem:[#allocation0]]
  $region22: #{tpu_custom_call.1} parent=0
    _
  %s5 = ssub.s32 1, %s3
  %s6 = scalar_select 0, %s5, %s3
  %7 = sst [smem:[#allocation2]] %s0
  $region1: #{tpu_custom_call.1} parent=0
    #allocation3 [shape = 'u8[2129920]{0}', space=vmem, size = 0x208000, scoped, tag = 'input window, operand 1, single buffered']
    #allocation4 [shape = 's32[1]{0}', space=sflag, size = 0x4, scoped, tag = 'scoped memory for tpu_custom_call.1']
    #allocation5 [shape = 's32[1]{0}', space=sflag, size = 0x4, scoped, tag = 'scoped memory for tpu_custom_call.1']
    #allocation6 [shape = 'u8[2129920]{0}', space=vmem, size = 0x208000, scoped, tag = 'output window, operand 0, single buffered']
    %8 = vsyncpa [#allocation4], 0
    %9 = vsyncpa [#allocation5], 0
    // Predicated region
    $region2: #{tpu_custom_call.1} parent=1 // pred_check
      _
    $region3: #{tpu_custom_call.1} parent=1 // pred_check_branch
      %11 = sbr.rel (0) target = $region5
    $region4: #{tpu_custom_call.1} parent=1 // pred_region
      _
    $region5: #{tpu_custom_call.1} parent=1 // pred_fallthru
      _
    // Predicated region
    $region6: #{tpu_custom_call.1} parent=1 // pred_check
      _
    $region7: #{tpu_custom_call.1} parent=1 // pred_check_branch
      %13 = sbr.rel (0) target = $region9
    $region8: #{tpu_custom_call.1} parent=1 // pred_region
      %s15 = ssub.s32 66560, 66560
      %16 = vsyncadd [#allocation4], %s15
      %s17 = sshll.u32 [#allocation3], 4
      %s18 = int_to_ptr.vmem [resolvable:$true] %s17
      %23 = dma.hbm_to_vmem [thread:$0]  %s1, 66560, %s18, [#allocation4], 512, 512, 32
    $region9: #{tpu_custom_call.1} parent=1 // pred_fallthru
      _
    // Predicated region
    $region10: #{tpu_custom_call.1} parent=1 // pred_check
      _
    $region11: #{tpu_custom_call.1} parent=1 // pred_check_branch
      %25 = sbr.rel (0) target = $region13
    $region12: #{tpu_custom_call.1} parent=1 // pred_region
      %26 = dma.done [#allocation4], 66560
    $region13: #{tpu_custom_call.1} parent=1 // pred_fallthru
      _
    %s27 = sld [smem:[#allocation2]]
    %v28 = vld [vmem:[#allocation3] sm:$0xff]
    %v29 = vld [vmem:[#allocation3 + $0x8] sm:$0xff]
    %v30 = vld [vmem:[#allocation3 + $0x10] sm:$0xff]
    %v31 = vld [vmem:[#allocation3 + $0x18] sm:$0xff]
    %v32 = vld [vmem:[#allocation3 + $0x20] sm:$0xff]
    %v33 = vld [vmem:[#allocation3 + $0x28] sm:$0xff]
    %v34 = vld [vmem:[#allocation3 + $0x30] sm:$0xff]
    %v35 = vld [vmem:[#allocation3 + $0x38] sm:$0xff]
    %v36 = vld [vmem:[#allocation3 + $0x40] sm:$0xff]
    %v37 = vld [vmem:[#allocation3 + $0x48] sm:$0xff]
    %v38 = vld [vmem:[#allocation3 + $0x50] sm:$0xff]
    %v39 = vld [vmem:[#allocation3 + $0x58] sm:$0xff]
    %v40 = vld [vmem:[#allocation3 + $0x60] sm:$0xff]
    %v41 = vld [vmem:[#allocation3 + $0x68] sm:$0xff]
    %v42 = vld [vmem:[#allocation3 + $0x70] sm:$0xff]
    %v43 = vld [vmem:[#allocation3 + $0x78] sm:$0xff]
    %v44 = vld [vmem:[#allocation3 + $0x80] sm:$0xff]
    %v45 = vld [vmem:[#allocation3 + $0x88] sm:$0xff]
    %v46 = vld [vmem:[#allocation3 + $0x90] sm:$0xff]
    %v47 = vld [vmem:[#allocation3 + $0x98] sm:$0xff]
    %v48 = vld [vmem:[#allocation3 + $0xa0] sm:$0xff]
    %v49 = vld [vmem:[#allocation3 + $0xa8] sm:$0xff]
    %v50 = vld [vmem:[#allocation3 + $0xb0] sm:$0xff]
    %v51 = vld [vmem:[#allocation3 + $0xb8] sm:$0xff]
    %v52 = vld [vmem:[#allocation3 + $0xc0] sm:$0xff]
    %v53 = vld [vmem:[#allocation3 + $0xc8] sm:$0xff]
    %v54 = vld [vmem:[#allocation3 + $0xd0] sm:$0xff]
    %v55 = vld [vmem:[#allocation3 + $0xd8] sm:$0xff]
    %v56 = vld [vmem:[#allocation3 + $0xe0] sm:$0xff]
    %v57 = vld [vmem:[#allocation3 + $0xe8] sm:$0xff]
    %v58 = vld [vmem:[#allocation3 + $0xf0] sm:$0xff]
    %v59 = vld [vmem:[#allocation3 + $0xf8] sm:$0xff]
    %v60 = vld [vmem:[#allocation3 + $0x100] sm:$0xff]
    %v61 = vld [vmem:[#allocation3 + $0x108] sm:$0xff]
    %v62 = vld [vmem:[#allocation3 + $0x110] sm:$0xff]
    %v63 = vld [vmem:[#allocation3 + $0x118] sm:$0xff]
    %v64 = vld [vmem:[#allocation3 + $0x120] sm:$0xff]
    %v65 = vld [vmem:[#allocation3 + $0x128] sm:$0xff]
    %v66 = vld [vmem:[#allocation3 + $0x130] sm:$0xff]
    %v67 = vld [vmem:[#allocation3 + $0x138] sm:$0xff]
    %v68 = vld [vmem:[#allocation3 + $0x140] sm:$0xff]
    %v69 = vld [vmem:[#allocation3 + $0x148] sm:$0xff]
    %v70 = vld [vmem:[#allocation3 + $0x150] sm:$0xff]
    %v71 = vld [vmem:[#allocation3 + $0x158] sm:$0xff]
    %v72 = vld [vmem:[#allocation3 + $0x160] sm:$0xff]
    %v73 = vld [vmem:[#allocation3 + $0x168] sm:$0xff]
    %v74 = vld [vmem:[#allocation3 + $0x170] sm:$0xff]
    %v75 = vld [vmem:[#allocation3 + $0x178] sm:$0xff]
    %v76 = vld [vmem:[#allocation3 + $0x180] sm:$0xff]
    %v77 = vld [vmem:[#allocation3 + $0x188] sm:$0xff]
    %v78 = vld [vmem:[#allocation3 + $0x190] sm:$0xff]
    %v79 = vld [vmem:[#allocation3 + $0x198] sm:$0xff]
    %v80 = vld [vmem:[#allocation3 + $0x1a0] sm:$0xff]
    %v81 = vld [vmem:[#allocation3 + $0x1a8] sm:$0xff]
    %v82 = vld [vmem:[#allocation3 + $0x1b0] sm:$0xff]
    %v83 = vld [vmem:[#allocation3 + $0x1b8] sm:$0xff]
    %v84 = vld [vmem:[#allocation3 + $0x1c0] sm:$0xff]
    %v85 = vld [vmem:[#allocation3 + $0x1c8] sm:$0xff]
    %v86 = vld [vmem:[#allocation3 + $0x1d0] sm:$0xff]
    %v87 = vld [vmem:[#allocation3 + $0x1d8] sm:$0xff]
    %v88 = vld [vmem:[#allocation3 + $0x1e0] sm:$0xff]
    %v89 = vld [vmem:[#allocation3 + $0x1e8] sm:$0xff]
    %v90 = vld [vmem:[#allocation3 + $0x1f0] sm:$0xff]
    %v91 = vld [vmem:[#allocation3 + $0x1f8] sm:$0xff]
    %v92 = vld [vmem:[#allocation3 + $0x200] sm:$0xff]
    %v93 = vld [vmem:[#allocation3 + $0x208] sm:$0xff]
    %v94 = vld [vmem:[#allocation3 + $0x210] sm:$0xff]
    %v95 = vld [vmem:[#allocation3 + $0x218] sm:$0xff]
    %v96 = vld [vmem:[#allocation3 + $0x220] sm:$0xff]
    %v97 = vld [vmem:[#allocation3 + $0x228] sm:$0xff]
    %v98 = vld [vmem:[#allocation3 + $0x230] sm:$0xff]
    %v99 = vld [vmem:[#allocation3 + $0x238] sm:$0xff]
    %v100 = vld [vmem:[#allocation3 + $0x240] sm:$0xff]
    %v101 = vld [vmem:[#allocation3 + $0x248] sm:$0xff]
    %v102 = vld [vmem:[#allocation3 + $0x250] sm:$0xff]
    %v103 = vld [vmem:[#allocation3 + $0x258] sm:$0xff]
    %v104 = vld [vmem:[#allocation3 + $0x260] sm:$0xff]
    %v105 = vld [vmem:[#allocation3 + $0x268] sm:$0xff]
    %v106 = vld [vmem:[#allocation3 + $0x270] sm:$0xff]
    %v107 = vld [vmem:[#allocation3 + $0x278] sm:$0xff]
    %v108 = vld [vmem:[#allocation3 + $0x280] sm:$0xff]
    %v109 = vld [vmem:[#allocation3 + $0x288] sm:$0xff]
    %v110 = vld [vmem:[#allocation3 + $0x290] sm:$0xff]
    %v111 = vld [vmem:[#allocation3 + $0x298] sm:$0xff]
    %v112 = vld [vmem:[#allocation3 + $0x2a0] sm:$0xff]
    %v113 = vld [vmem:[#allocation3 + $0x2a8] sm:$0xff]
    %v114 = vld [vmem:[#allocation3 + $0x2b0] sm:$0xff]
    %v115 = vld [vmem:[#allocation3 + $0x2b8] sm:$0xff]
    %v116 = vld [vmem:[#allocation3 + $0x2c0] sm:$0xff]
    %v117 = vld [vmem:[#allocation3 + $0x2c8] sm:$0xff]
    %v118 = vld [vmem:[#allocation3 + $0x2d0] sm:$0xff]
    %v119 = vld [vmem:[#allocation3 + $0x2d8] sm:$0xff]
    %v120 = vld [vmem:[#allocation3 + $0x2e0] sm:$0xff]
    %v121 = vld [vmem:[#allocation3 + $0x2e8] sm:$0xff]
    %v122 = vld [vmem:[#allocation3 + $0x2f0] sm:$0xff]
    %v123 = vld [vmem:[#allocation3 + $0x2f8] sm:$0xff]
    %v124 = vld [vmem:[#allocation3 + $0x300] sm:$0xff]
    %v125 = vld [vmem:[#allocation3 + $0x308] sm:$0xff]
    %v126 = vld [vmem:[#allocation3 + $0x310] sm:$0xff]
    %v127 = vld [vmem:[#allocation3 + $0x318] sm:$0xff]
    %v128 = vld [vmem:[#allocation3 + $0x320] sm:$0xff]
    %v129 = vld [vmem:[#allocation3 + $0x328] sm:$0xff]
    %v130 = vld [vmem:[#allocation3 + $0x330] sm:$0xff]
    %v131 = vld [vmem:[#allocation3 + $0x338] sm:$0xff]
    %v132 = vld [vmem:[#allocation3 + $0x340] sm:$0xff]
    %v133 = vld [vmem:[#allocation3 + $0x348] sm:$0xff]
    %v134 = vld [vmem:[#allocation3 + $0x350] sm:$0xff]
    %v135 = vld [vmem:[#allocation3 + $0x358] sm:$0xff]
    %v136 = vld [vmem:[#allocation3 + $0x360] sm:$0xff]
    %v137 = vld [vmem:[#allocation3 + $0x368] sm:$0xff]
    %v138 = vld [vmem:[#allocation3 + $0x370] sm:$0xff]
    %v139 = vld [vmem:[#allocation3 + $0x378] sm:$0xff]
    %v140 = vld [vmem:[#allocation3 + $0x380] sm:$0xff]
    %v141 = vld [vmem:[#allocation3 + $0x388] sm:$0xff]
    %v142 = vld [vmem:[#allocation3 + $0x390] sm:$0xff]
    %v143 = vld [vmem:[#allocation3 + $0x398] sm:$0xff]
    %v144 = vld [vmem:[#allocation3 + $0x3a0] sm:$0xff]
    %v145 = vld [vmem:[#allocation3 + $0x3a8] sm:$0xff]
    %v146 = vld [vmem:[#allocation3 + $0x3b0] sm:$0xff]
    %v147 = vld [vmem:[#allocation3 + $0x3b8] sm:$0xff]
    %v148 = vld [vmem:[#allocation3 + $0x3c0] sm:$0xff]
    %v149 = vld [vmem:[#allocation3 + $0x3c8] sm:$0xff]
    %v150 = vld [vmem:[#allocation3 + $0x3d0] sm:$0xff]
    %v151 = vld [vmem:[#allocation3 + $0x3d8] sm:$0xff]
    %v152 = vld [vmem:[#allocation3 + $0x3e0] sm:$0xff]
    %v153 = vld [vmem:[#allocation3 + $0x3e8] sm:$0xff]
    %v154 = vld [vmem:[#allocation3 + $0x3f0] sm:$0xff]
    %v155 = vld [vmem:[#allocation3 + $0x3f8] sm:$0xff]
    %v156 = vld [vmem:[#allocation3 + $0x400] sm:$0xff]
    %v157 = vld [vmem:[#allocation3 + $0x408] sm:$0xff]
    %v158 = vld [vmem:[#allocation3 + $0x410] sm:$0xff]
    %v159 = vld [vmem:[#allocation3 + $0x418] sm:$0xff]
    %v160 = vld [vmem:[#allocation3 + $0x420] sm:$0xff]
    %v161 = vld [vmem:[#allocation3 + $0x428] sm:$0xff]
    %v162 = vld [vmem:[#allocation3 + $0x430] sm:$0xff]
    %v163 = vld [vmem:[#allocation3 + $0x438] sm:$0xff]
    %v164 = vld [vmem:[#allocation3 + $0x440] sm:$0xff]
    %v165 = vld [vmem:[#allocation3 + $0x448] sm:$0xff]
    %v166 = vld [vmem:[#allocation3 + $0x450] sm:$0xff]
    %v167 = vld [vmem:[#allocation3 + $0x458] sm:$0xff]
    %v168 = vld [vmem:[#allocation3 + $0x460] sm:$0xff]
    %v169 = vld [vmem:[#allocation3 + $0x468] sm:$0xff]
    %v170 = vld [vmem:[#allocation3 + $0x470] sm:$0xff]
    %v171 = vld [vmem:[#allocation3 + $0x478] sm:$0xff]
    %v172 = vld [vmem:[#allocation3 + $0x480] sm:$0xff]
    %v173 = vld [vmem:[#allocation3 + $0x488] sm:$0xff]
    %v174 = vld [vmem:[#allocation3 + $0x490] sm:$0xff]
    %v175 = vld [vmem:[#allocation3 + $0x498] sm:$0xff]
    %v176 = vld [vmem:[#allocation3 + $0x4a0] sm:$0xff]
    %v177 = vld [vmem:[#allocation3 + $0x4a8] sm:$0xff]
    %v178 = vld [vmem:[#allocation3 + $0x4b0] sm:$0xff]
    %v179 = vld [vmem:[#allocation3 + $0x4b8] sm:$0xff]
    %v180 = vld [vmem:[#allocation3 + $0x4c0] sm:$0xff]
    %v181 = vld [vmem:[#allocation3 + $0x4c8] sm:$0xff]
    %v182 = vld [vmem:[#allocation3 + $0x4d0] sm:$0xff]
    %v183 = vld [vmem:[#allocation3 + $0x4d8] sm:$0xff]
    %v184 = vld [vmem:[#allocation3 + $0x4e0] sm:$0xff]
    %v185 = vld [vmem:[#allocation3 + $0x4e8] sm:$0xff]
    %v186 = vld [vmem:[#allocation3 + $0x4f0] sm:$0xff]
    %v187 = vld [vmem:[#allocation3 + $0x4f8] sm:$0xff]
    %v188 = vld [vmem:[#allocation3 + $0x500] sm:$0xff]
    %v189 = vld [vmem:[#allocation3 + $0x508] sm:$0xff]
    %v190 = vld [vmem:[#allocation3 + $0x510] sm:$0xff]
    %v191 = vld [vmem:[#allocation3 + $0x518] sm:$0xff]
    %v192 = vld [vmem:[#allocation3 + $0x520] sm:$0xff]
    %v193 = vld [vmem:[#allocation3 + $0x528] sm:$0xff]
    %v194 = vld [vmem:[#allocation3 + $0x530] sm:$0xff]
    %v195 = vld [vmem:[#allocation3 + $0x538] sm:$0xff]
    %v196 = vld [vmem:[#allocation3 + $0x540] sm:$0xff]
    %v197 = vld [vmem:[#allocation3 + $0x548] sm:$0xff]
    %v198 = vld [vmem:[#allocation3 + $0x550] sm:$0xff]
    %v199 = vld [vmem:[#allocation3 + $0x558] sm:$0xff]
    %v200 = vld [vmem:[#allocation3 + $0x560] sm:$0xff]
    %v201 = vld [vmem:[#allocation3 + $0x568] sm:$0xff]
    %v202 = vld [vmem:[#allocation3 + $0x570] sm:$0xff]
    %v203 = vld [vmem:[#allocation3 + $0x578] sm:$0xff]
    %v204 = vld [vmem:[#allocation3 + $0x580] sm:$0xff]
    %v205 = vld [vmem:[#allocation3 + $0x588] sm:$0xff]
    %v206 = vld [vmem:[#allocation3 + $0x590] sm:$0xff]
    %v207 = vld [vmem:[#allocation3 + $0x598] sm:$0xff]
    %v208 = vld [vmem:[#allocation3 + $0x5a0] sm:$0xff]
    %v209 = vld [vmem:[#allocation3 + $0x5a8] sm:$0xff]
    %v210 = vld [vmem:[#allocation3 + $0x5b0] sm:$0xff]
    %v211 = vld [vmem:[#allocation3 + $0x5b8] sm:$0xff]
    %v212 = vld [vmem:[#allocation3 + $0x5c0] sm:$0xff]
    %v213 = vld [vmem:[#allocation3 + $0x5c8] sm:$0xff]
    %v214 = vld [vmem:[#allocation3 + $0x5d0] sm:$0xff]
    %v215 = vld [vmem:[#allocation3 + $0x5d8] sm:$0xff]
    %v216 = vld [vmem:[#allocation3 + $0x5e0] sm:$0xff]
    %v217 = vld [vmem:[#allocation3 + $0x5e8] sm:$0xff]
    %v218 = vld [vmem:[#allocation3 + $0x5f0] sm:$0xff]
    %v219 = vld [vmem:[#allocation3 + $0x5f8] sm:$0xff]
    %v220 = vld [vmem:[#allocation3 + $0x600] sm:$0xff]
    %v221 = vld [vmem:[#allocation3 + $0x608] sm:$0xff]
    %v222 = vld [vmem:[#allocation3 + $0x610] sm:$0xff]
    %v223 = vld [vmem:[#allocation3 + $0x618] sm:$0xff]
    %v224 = vld [vmem:[#allocation3 + $0x620] sm:$0xff]
    %v225 = vld [vmem:[#allocation3 + $0x628] sm:$0xff]
    %v226 = vld [vmem:[#allocation3 + $0x630] sm:$0xff]
    %v227 = vld [vmem:[#allocation3 + $0x638] sm:$0xff]
    %v228 = vld [vmem:[#allocation3 + $0x640] sm:$0xff]
    %v229 = vld [vmem:[#allocation3 + $0x648] sm:$0xff]
    %v230 = vld [vmem:[#allocation3 + $0x650] sm:$0xff]
    %v231 = vld [vmem:[#allocation3 + $0x658] sm:$0xff]
    %v232 = vld [vmem:[#allocation3 + $0x660] sm:$0xff]
    %v233 = vld [vmem:[#allocation3 + $0x668] sm:$0xff]
    %v234 = vld [vmem:[#allocation3 + $0x670] sm:$0xff]
    %v235 = vld [vmem:[#allocation3 + $0x678] sm:$0xff]
    %v236 = vld [vmem:[#allocation3 + $0x680] sm:$0xff]
    %v237 = vld [vmem:[#allocation3 + $0x688] sm:$0xff]
    %v238 = vld [vmem:[#allocation3 + $0x690] sm:$0xff]
    %v239 = vld [vmem:[#allocation3 + $0x698] sm:$0xff]
    %v240 = vld [vmem:[#allocation3 + $0x6a0] sm:$0xff]
    %v241 = vld [vmem:[#allocation3 + $0x6a8] sm:$0xff]
    %v242 = vld [vmem:[#allocation3 + $0x6b0] sm:$0xff]
    %v243 = vld [vmem:[#allocation3 + $0x6b8] sm:$0xff]
    %v244 = vld [vmem:[#allocation3 + $0x6c0] sm:$0xff]
    %v245 = vld [vmem:[#allocation3 + $0x6c8] sm:$0xff]
    %v246 = vld [vmem:[#allocation3 + $0x6d0] sm:$0xff]
    %v247 = vld [vmem:[#allocation3 + $0x6d8] sm:$0xff]
    %v248 = vld [vmem:[#allocation3 + $0x6e0] sm:$0xff]
    %v249 = vld [vmem:[#allocation3 + $0x6e8] sm:$0xff]
    %v250 = vld [vmem:[#allocation3 + $0x6f0] sm:$0xff]
    %v251 = vld [vmem:[#allocation3 + $0x6f8] sm:$0xff]
    %v252 = vld [vmem:[#allocation3 + $0x700] sm:$0xff]
    %v253 = vld [vmem:[#allocation3 + $0x708] sm:$0xff]
    %v254 = vld [vmem:[#allocation3 + $0x710] sm:$0xff]
    %v255 = vld [vmem:[#allocation3 + $0x718] sm:$0xff]
    %v256 = vld [vmem:[#allocation3 + $0x720] sm:$0xff]
    %v257 = vld [vmem:[#allocation3 + $0x728] sm:$0xff]
    %v258 = vld [vmem:[#allocation3 + $0x730] sm:$0xff]
    %v259 = vld [vmem:[#allocation3 + $0x738] sm:$0xff]
    %v260 = vld [vmem:[#allocation3 + $0x740] sm:$0xff]
    %v261 = vld [vmem:[#allocation3 + $0x748] sm:$0xff]
    %v262 = vld [vmem:[#allocation3 + $0x750] sm:$0xff]
    %v263 = vld [vmem:[#allocation3 + $0x758] sm:$0xff]
    %v264 = vld [vmem:[#allocation3 + $0x760] sm:$0xff]
    %v265 = vld [vmem:[#allocation3 + $0x768] sm:$0xff]
    %v266 = vld [vmem:[#allocation3 + $0x770] sm:$0xff]
    %v267 = vld [vmem:[#allocation3 + $0x778] sm:$0xff]
    %v268 = vld [vmem:[#allocation3 + $0x780] sm:$0xff]
    %v269 = vld [vmem:[#allocation3 + $0x788] sm:$0xff]
    %v270 = vld [vmem:[#allocation3 + $0x790] sm:$0xff]
    %v271 = vld [vmem:[#allocation3 + $0x798] sm:$0xff]
    %v272 = vld [vmem:[#allocation3 + $0x7a0] sm:$0xff]
    %v273 = vld [vmem:[#allocation3 + $0x7a8] sm:$0xff]
    %v274 = vld [vmem:[#allocation3 + $0x7b0] sm:$0xff]
    %v275 = vld [vmem:[#allocation3 + $0x7b8] sm:$0xff]
    %v276 = vld [vmem:[#allocation3 + $0x7c0] sm:$0xff]
    %v277 = vld [vmem:[#allocation3 + $0x7c8] sm:$0xff]
    %v278 = vld [vmem:[#allocation3 + $0x7d0] sm:$0xff]
    %v279 = vld [vmem:[#allocation3 + $0x7d8] sm:$0xff]
    %v280 = vld [vmem:[#allocation3 + $0x7e0] sm:$0xff]
    %v281 = vld [vmem:[#allocation3 + $0x7e8] sm:$0xff]
    %v282 = vld [vmem:[#allocation3 + $0x7f0] sm:$0xff]
    %v283 = vld [vmem:[#allocation3 + $0x7f8] sm:$0xff]
    %v284 = vld [vmem:[#allocation3 + $0x800] sm:$0xff]
    %v285 = vld [vmem:[#allocation3 + $0x808] sm:$0xff]
    %v286 = vld [vmem:[#allocation3 + $0x810] sm:$0xff]
    %v287 = vld [vmem:[#allocation3 + $0x818] sm:$0xff]
    %v288 = vld [vmem:[#allocation3 + $0x820] sm:$0xff]
    %v289 = vld [vmem:[#allocation3 + $0x828] sm:$0xff]
    %v290 = vld [vmem:[#allocation3 + $0x830] sm:$0xff]
    %v291 = vld [vmem:[#allocation3 + $0x838] sm:$0xff]
    %v292 = vld [vmem:[#allocation3 + $0x840] sm:$0xff]
    %v293 = vld [vmem:[#allocation3 + $0x848] sm:$0xff]
    %v294 = vld [vmem:[#allocation3 + $0x850] sm:$0xff]
    %v295 = vld [vmem:[#allocation3 + $0x858] sm:$0xff]
    %v296 = vld [vmem:[#allocation3 + $0x860] sm:$0xff]
    %v297 = vld [vmem:[#allocation3 + $0x868] sm:$0xff]
    %v298 = vld [vmem:[#allocation3 + $0x870] sm:$0xff]
    %v299 = vld [vmem:[#allocation3 + $0x878] sm:$0xff]
    %v300 = vld [vmem:[#allocation3 + $0x880] sm:$0xff]
    %v301 = vld [vmem:[#allocation3 + $0x888] sm:$0xff]
    %v302 = vld [vmem:[#allocation3 + $0x890] sm:$0xff]
    %v303 = vld [vmem:[#allocation3 + $0x898] sm:$0xff]
    %v304 = vld [vmem:[#allocation3 + $0x8a0] sm:$0xff]
    %v305 = vld [vmem:[#allocation3 + $0x8a8] sm:$0xff]
    %v306 = vld [vmem:[#allocation3 + $0x8b0] sm:$0xff]
    %v307 = vld [vmem:[#allocation3 + $0x8b8] sm:$0xff]
    %v308 = vld [vmem:[#allocation3 + $0x8c0] sm:$0xff]
    %v309 = vld [vmem:[#allocation3 + $0x8c8] sm:$0xff]
    %v310 = vld [vmem:[#allocation3 + $0x8d0] sm:$0xff]
    %v311 = vld [vmem:[#allocation3 + $0x8d8] sm:$0xff]
    %v312 = vld [vmem:[#allocation3 + $0x8e0] sm:$0xff]
    %v313 = vld [vmem:[#allocation3 + $0x8e8] sm:$0xff]
    %v314 = vld [vmem:[#allocation3 + $0x8f0] sm:$0xff]
    %v315 = vld [vmem:[#allocation3 + $0x8f8] sm:$0xff]
    %v316 = vld [vmem:[#allocation3 + $0x900] sm:$0xff]
    %v317 = vld [vmem:[#allocation3 + $0x908] sm:$0xff]
    %v318 = vld [vmem:[#allocation3 + $0x910] sm:$0xff]
    %v319 = vld [vmem:[#allocation3 + $0x918] sm:$0xff]
    %v320 = vld [vmem:[#allocation3 + $0x920] sm:$0xff]
    %v321 = vld [vmem:[#allocation3 + $0x928] sm:$0xff]
    %v322 = vld [vmem:[#allocation3 + $0x930] sm:$0xff]
    %v323 = vld [vmem:[#allocation3 + $0x938] sm:$0xff]
    %v324 = vld [vmem:[#allocation3 + $0x940] sm:$0xff]
    %v325 = vld [vmem:[#allocation3 + $0x948] sm:$0xff]
    %v326 = vld [vmem:[#allocation3 + $0x950] sm:$0xff]
    %v327 = vld [vmem:[#allocation3 + $0x958] sm:$0xff]
    %v328 = vld [vmem:[#allocation3 + $0x960] sm:$0xff]
    %v329 = vld [vmem:[#allocation3 + $0x968] sm:$0xff]
    %v330 = vld [vmem:[#allocation3 + $0x970] sm:$0xff]
    %v331 = vld [vmem:[#allocation3 + $0x978] sm:$0xff]
    %v332 = vld [vmem:[#allocation3 + $0x980] sm:$0xff]
    %v333 = vld [vmem:[#allocation3 + $0x988] sm:$0xff]
    %v334 = vld [vmem:[#allocation3 + $0x990] sm:$0xff]
    %v335 = vld [vmem:[#allocation3 + $0x998] sm:$0xff]
    %v336 = vld [vmem:[#allocation3 + $0x9a0] sm:$0xff]
    %v337 = vld [vmem:[#allocation3 + $0x9a8] sm:$0xff]
    %v338 = vld [vmem:[#allocation3 + $0x9b0] sm:$0xff]
    %v339 = vld [vmem:[#allocation3 + $0x9b8] sm:$0xff]
    %v340 = vld [vmem:[#allocation3 + $0x9c0] sm:$0xff]
    %v341 = vld [vmem:[#allocation3 + $0x9c8] sm:$0xff]
    %v342 = vld [vmem:[#allocation3 + $0x9d0] sm:$0xff]
    %v343 = vld [vmem:[#allocation3 + $0x9d8] sm:$0xff]
    %v344 = vld [vmem:[#allocation3 + $0x9e0] sm:$0xff]
    %v345 = vld [vmem:[#allocation3 + $0x9e8] sm:$0xff]
    %v346 = vld [vmem:[#allocation3 + $0x9f0] sm:$0xff]
    %v347 = vld [vmem:[#allocation3 + $0x9f8] sm:$0xff]
    %v348 = vld [vmem:[#allocation3 + $0xa00] sm:$0xff]
    %v349 = vld [vmem:[#allocation3 + $0xa08] sm:$0xff]
    %v350 = vld [vmem:[#allocation3 + $0xa10] sm:$0xff]
    %v351 = vld [vmem:[#allocation3 + $0xa18] sm:$0xff]
    %v352 = vld [vmem:[#allocation3 + $0xa20] sm:$0xff]
    %v353 = vld [vmem:[#allocation3 + $0xa28] sm:$0xff]
    %v354 = vld [vmem:[#allocation3 + $0xa30] sm:$0xff]
    %v355 = vld [vmem:[#allocation3 + $0xa38] sm:$0xff]
    %v356 = vld [vmem:[#allocation3 + $0xa40] sm:$0xff]
    %v357 = vld [vmem:[#allocation3 + $0xa48] sm:$0xff]
    %v358 = vld [vmem:[#allocation3 + $0xa50] sm:$0xff]
    %v359 = vld [vmem:[#allocation3 + $0xa58] sm:$0xff]
    %v360 = vld [vmem:[#allocation3 + $0xa60] sm:$0xff]
    %v361 = vld [vmem:[#allocation3 + $0xa68] sm:$0xff]
    %v362 = vld [vmem:[#allocation3 + $0xa70] sm:$0xff]
    %v363 = vld [vmem:[#allocation3 + $0xa78] sm:$0xff]
    %v364 = vld [vmem:[#allocation3 + $0xa80] sm:$0xff]
    %v365 = vld [vmem:[#allocation3 + $0xa88] sm:$0xff]
    %v366 = vld [vmem:[#allocation3 + $0xa90] sm:$0xff]
    %v367 = vld [vmem:[#allocation3 + $0xa98] sm:$0xff]
    %v368 = vld [vmem:[#allocation3 + $0xaa0] sm:$0xff]
    %v369 = vld [vmem:[#allocation3 + $0xaa8] sm:$0xff]
    %v370 = vld [vmem:[#allocation3 + $0xab0] sm:$0xff]
    %v371 = vld [vmem:[#allocation3 + $0xab8] sm:$0xff]
    %v372 = vld [vmem:[#allocation3 + $0xac0] sm:$0xff]
    %v373 = vld [vmem:[#allocation3 + $0xac8] sm:$0xff]
    %v374 = vld [vmem:[#allocation3 + $0xad0] sm:$0xff]
    %v375 = vld [vmem:[#allocation3 + $0xad8] sm:$0xff]
    %v376 = vld [vmem:[#allocation3 + $0xae0] sm:$0xff]
    %v377 = vld [vmem:[#allocation3 + $0xae8] sm:$0xff]
    %v378 = vld [vmem:[#allocation3 + $0xaf0] sm:$0xff]
    %v379 = vld [vmem:[#allocation3 + $0xaf8] sm:$0xff]
    %v380 = vld [vmem:[#allocation3 + $0xb00] sm:$0xff]
    %v381 = vld [vmem:[#allocation3 + $0xb08] sm:$0xff]
    %v382 = vld [vmem:[#allocation3 + $0xb10] sm:$0xff]
    %v383 = vld [vmem:[#allocation3 + $0xb18] sm:$0xff]
    %v384 = vld [vmem:[#allocation3 + $0xb20] sm:$0xff]
    %v385 = vld [vmem:[#allocation3 + $0xb28] sm:$0xff]
    %v386 = vld [vmem:[#allocation3 + $0xb30] sm:$0xff]
    %v387 = vld [vmem:[#allocation3 + $0xb38] sm:$0xff]
    %v388 = vld [vmem:[#allocation3 + $0xb40] sm:$0xff]
    %v389 = vld [vmem:[#allocation3 + $0xb48] sm:$0xff]
    %v390 = vld [vmem:[#allocation3 + $0xb50] sm:$0xff]
    %v391 = vld [vmem:[#allocation3 + $0xb58] sm:$0xff]
    %v392 = vld [vmem:[#allocation3 + $0xb60] sm:$0xff]
    %v393 = vld [vmem:[#allocation3 + $0xb68] sm:$0xff]
    %v394 = vld [vmem:[#allocation3 + $0xb70] sm:$0xff]
    %v395 = vld [vmem:[#allocation3 + $0xb78] sm:$0xff]
    %v396 = vld [vmem:[#allocation3 + $0xb80] sm:$0xff]
    %v397 = vld [vmem:[#allocation3 + $0xb88] sm:$0xff]
    %v398 = vld [vmem:[#allocation3 + $0xb90] sm:$0xff]
    %v399 = vld [vmem:[#allocation3 + $0xb98] sm:$0xff]
    %v400 = vld [vmem:[#allocation3 + $0xba0] sm:$0xff]
    %v401 = vld [vmem:[#allocation3 + $0xba8] sm:$0xff]
    %v402 = vld [vmem:[#allocation3 + $0xbb0] sm:$0xff]
    %v403 = vld [vmem:[#allocation3 + $0xbb8] sm:$0xff]
    %v404 = vld [vmem:[#allocation3 + $0xbc0] sm:$0xff]
    %v405 = vld [vmem:[#allocation3 + $0xbc8] sm:$0xff]
    %v406 = vld [vmem:[#allocation3 + $0xbd0] sm:$0xff]
    %v407 = vld [vmem:[#allocation3 + $0xbd8] sm:$0xff]
    %v408 = vld [vmem:[#allocation3 + $0xbe0] sm:$0xff]
    %v409 = vld [vmem:[#allocation3 + $0xbe8] sm:$0xff]
    %v410 = vld [vmem:[#allocation3 + $0xbf0] sm:$0xff]
    %v411 = vld [vmem:[#allocation3 + $0xbf8] sm:$0xff]
    %v412 = vld [vmem:[#allocation3 + $0xc00] sm:$0xff]
    %v413 = vld [vmem:[#allocation3 + $0xc08] sm:$0xff]
    %v414 = vld [vmem:[#allocation3 + $0xc10] sm:$0xff]
    %v415 = vld [vmem:[#allocation3 + $0xc18] sm:$0xff]
    %v416 = vld [vmem:[#allocation3 + $0xc20] sm:$0xff]
    %v417 = vld [vmem:[#allocation3 + $0xc28] sm:$0xff]
    %v418 = vld [vmem:[#allocation3 + $0xc30] sm:$0xff]
    %v419 = vld [vmem:[#allocation3 + $0xc38] sm:$0xff]
    %v420 = vld [vmem:[#allocation3 + $0xc40] sm:$0xff]
    %v421 = vld [vmem:[#allocation3 + $0xc48] sm:$0xff]
    %v422 = vld [vmem:[#allocation3 + $0xc50] sm:$0xff]
    %v423 = vld [vmem:[#allocation3 + $0xc58] sm:$0xff]
    %v424 = vld [vmem:[#allocation3 + $0xc60] sm:$0xff]
    %v425 = vld [vmem:[#allocation3 + $0xc68] sm:$0xff]
    %v426 = vld [vmem:[#allocation3 + $0xc70] sm:$0xff]
    %v427 = vld [vmem:[#allocation3 + $0xc78] sm:$0xff]
    %v428 = vld [vmem:[#allocation3 + $0xc80] sm:$0xff]
    %v429 = vld [vmem:[#allocation3 + $0xc88] sm:$0xff]
    %v430 = vld [vmem:[#allocation3 + $0xc90] sm:$0xff]
    %v431 = vld [vmem:[#allocation3 + $0xc98] sm:$0xff]
    %v432 = vld [vmem:[#allocation3 + $0xca0] sm:$0xff]
    %v433 = vld [vmem:[#allocation3 + $0xca8] sm:$0xff]
    %v434 = vld [vmem:[#allocation3 + $0xcb0] sm:$0xff]
    %v435 = vld [vmem:[#allocation3 + $0xcb8] sm:$0xff]
    %v436 = vld [vmem:[#allocation3 + $0xcc0] sm:$0xff]
    %v437 = vld [vmem:[#allocation3 + $0xcc8] sm:$0xff]
    %v438 = vld [vmem:[#allocation3 + $0xcd0] sm:$0xff]
    %v439 = vld [vmem:[#allocation3 + $0xcd8] sm:$0xff]
    %v440 = vld [vmem:[#allocation3 + $0xce0] sm:$0xff]
    %v441 = vld [vmem:[#allocation3 + $0xce8] sm:$0xff]
    %v442 = vld [vmem:[#allocation3 + $0xcf0] sm:$0xff]
    %v443 = vld [vmem:[#allocation3 + $0xcf8] sm:$0xff]
    %v444 = vld [vmem:[#allocation3 + $0xd00] sm:$0xff]
    %v445 = vld [vmem:[#allocation3 + $0xd08] sm:$0xff]
    %v446 = vld [vmem:[#allocation3 + $0xd10] sm:$0xff]
    %v447 = vld [vmem:[#allocation3 + $0xd18] sm:$0xff]
    %v448 = vld [vmem:[#allocation3 + $0xd20] sm:$0xff]
    %v449 = vld [vmem:[#allocation3 + $0xd28] sm:$0xff]
    %v450 = vld [vmem:[#allocation3 + $0xd30] sm:$0xff]
    %v451 = vld [vmem:[#allocation3 + $0xd38] sm:$0xff]
    %v452 = vld [vmem:[#allocation3 + $0xd40] sm:$0xff]
    %v453 = vld [vmem:[#allocation3 + $0xd48] sm:$0xff]
    %v454 = vld [vmem:[#allocation3 + $0xd50] sm:$0xff]
    %v455 = vld [vmem:[#allocation3 + $0xd58] sm:$0xff]
    %v456 = vld [vmem:[#allocation3 + $0xd60] sm:$0xff]
    %v457 = vld [vmem:[#allocation3 + $0xd68] sm:$0xff]
    %v458 = vld [vmem:[#allocation3 + $0xd70] sm:$0xff]
    %v459 = vld [vmem:[#allocation3 + $0xd78] sm:$0xff]
    %v460 = vld [vmem:[#allocation3 + $0xd80] sm:$0xff]
    %v461 = vld [vmem:[#allocation3 + $0xd88] sm:$0xff]
    %v462 = vld [vmem:[#allocation3 + $0xd90] sm:$0xff]
    %v463 = vld [vmem:[#allocation3 + $0xd98] sm:$0xff]
    %v464 = vld [vmem:[#allocation3 + $0xda0] sm:$0xff]
    %v465 = vld [vmem:[#allocation3 + $0xda8] sm:$0xff]
    %v466 = vld [vmem:[#allocation3 + $0xdb0] sm:$0xff]
    %v467 = vld [vmem:[#allocation3 + $0xdb8] sm:$0xff]
    %v468 = vld [vmem:[#allocation3 + $0xdc0] sm:$0xff]
    %v469 = vld [vmem:[#allocation3 + $0xdc8] sm:$0xff]
    %v470 = vld [vmem:[#allocation3 + $0xdd0] sm:$0xff]
    %v471 = vld [vmem:[#allocation3 + $0xdd8] sm:$0xff]
    %v472 = vld [vmem:[#allocation3 + $0xde0] sm:$0xff]
    %v473 = vld [vmem:[#allocation3 + $0xde8] sm:$0xff]
    %v474 = vld [vmem:[#allocation3 + $0xdf0] sm:$0xff]
    %v475 = vld [vmem:[#allocation3 + $0xdf8] sm:$0xff]
    %v476 = vld [vmem:[#allocation3 + $0xe00] sm:$0xff]
    %v477 = vld [vmem:[#allocation3 + $0xe08] sm:$0xff]
    %v478 = vld [vmem:[#allocation3 + $0xe10] sm:$0xff]
    %v479 = vld [vmem:[#allocation3 + $0xe18] sm:$0xff]
    %v480 = vld [vmem:[#allocation3 + $0xe20] sm:$0xff]
    %v481 = vld [vmem:[#allocation3 + $0xe28] sm:$0xff]
    %v482 = vld [vmem:[#allocation3 + $0xe30] sm:$0xff]
    %v483 = vld [vmem:[#allocation3 + $0xe38] sm:$0xff]
    %v484 = vld [vmem:[#allocation3 + $0xe40] sm:$0xff]
    %v485 = vld [vmem:[#allocation3 + $0xe48] sm:$0xff]
    %v486 = vld [vmem:[#allocation3 + $0xe50] sm:$0xff]
    %v487 = vld [vmem:[#allocation3 + $0xe58] sm:$0xff]
    %v488 = vld [vmem:[#allocation3 + $0xe60] sm:$0xff]
    %v489 = vld [vmem:[#allocation3 + $0xe68] sm:$0xff]
    %v490 = vld [vmem:[#allocation3 + $0xe70] sm:$0xff]
    %v491 = vld [vmem:[#allocation3 + $0xe78] sm:$0xff]
    %v492 = vld [vmem:[#allocation3 + $0xe80] sm:$0xff]
    %v493 = vld [vmem:[#allocation3 + $0xe88] sm:$0xff]
    %v494 = vld [vmem:[#allocation3 + $0xe90] sm:$0xff]
    %v495 = vld [vmem:[#allocation3 + $0xe98] sm:$0xff]
    %v496 = vld [vmem:[#allocation3 + $0xea0] sm:$0xff]
    %v497 = vld [vmem:[#allocation3 + $0xea8] sm:$0xff]
    %v498 = vld [vmem:[#allocation3 + $0xeb0] sm:$0xff]
    %v499 = vld [vmem:[#allocation3 + $0xeb8] sm:$0xff]
    %v500 = vld [vmem:[#allocation3 + $0xec0] sm:$0xff]
    %v501 = vld [vmem:[#allocation3 + $0xec8] sm:$0xff]
    %v502 = vld [vmem:[#allocation3 + $0xed0] sm:$0xff]
    %v503 = vld [vmem:[#allocation3 + $0xed8] sm:$0xff]
    %v504 = vld [vmem:[#allocation3 + $0xee0] sm:$0xff]
    %v505 = vld [vmem:[#allocation3 + $0xee8] sm:$0xff]
    %v506 = vld [vmem:[#allocation3 + $0xef0] sm:$0xff]
    %v507 = vld [vmem:[#allocation3 + $0xef8] sm:$0xff]
    %v508 = vld [vmem:[#allocation3 + $0xf00] sm:$0xff]
    %v509 = vld [vmem:[#allocation3 + $0xf08] sm:$0xff]
    %v510 = vld [vmem:[#allocation3 + $0xf10] sm:$0xff]
    %v511 = vld [vmem:[#allocation3 + $0xf18] sm:$0xff]
    %v512 = vld [vmem:[#allocation3 + $0xf20] sm:$0xff]
    %v513 = vld [vmem:[#allocation3 + $0xf28] sm:$0xff]
    %v514 = vld [vmem:[#allocation3 + $0xf30] sm:$0xff]
    %v515 = vld [vmem:[#allocation3 + $0xf38] sm:$0xff]
    %v516 = vld [vmem:[#allocation3 + $0xf40] sm:$0xff]
    %v517 = vld [vmem:[#allocation3 + $0xf48] sm:$0xff]
    %v518 = vld [vmem:[#allocation3 + $0xf50] sm:$0xff]
    %v519 = vld [vmem:[#allocation3 + $0xf58] sm:$0xff]
    %v520 = vld [vmem:[#allocation3 + $0xf60] sm:$0xff]
    %v521 = vld [vmem:[#allocation3 + $0xf68] sm:$0xff]
    %v522 = vld [vmem:[#allocation3 + $0xf70] sm:$0xff]
    %v523 = vld [vmem:[#allocation3 + $0xf78] sm:$0xff]
    %v524 = vld [vmem:[#allocation3 + $0xf80] sm:$0xff]
    %v525 = vld [vmem:[#allocation3 + $0xf88] sm:$0xff]
    %v526 = vld [vmem:[#allocation3 + $0xf90] sm:$0xff]
    %v527 = vld [vmem:[#allocation3 + $0xf98] sm:$0xff]
    %v528 = vld [vmem:[#allocation3 + $0xfa0] sm:$0xff]
    %v529 = vld [vmem:[#allocation3 + $0xfa8] sm:$0xff]
    %v530 = vld [vmem:[#allocation3 + $0xfb0] sm:$0xff]
    %v531 = vld [vmem:[#allocation3 + $0xfb8] sm:$0xff]
    %v532 = vld [vmem:[#allocation3 + $0xfc0] sm:$0xff]
    %v533 = vld [vmem:[#allocation3 + $0xfc8] sm:$0xff]
    %v534 = vld [vmem:[#allocation3 + $0xfd0] sm:$0xff]
    %v535 = vld [vmem:[#allocation3 + $0xfd8] sm:$0xff]
    %v536 = vld [vmem:[#allocation3 + $0xfe0] sm:$0xff]
    %v537 = vld [vmem:[#allocation3 + $0xfe8] sm:$0xff]
    %v538 = vld [vmem:[#allocation3 + $0xff0] sm:$0xff]
    %v539 = vld [vmem:[#allocation3 + $0xff8] sm:$0xff]
    %v540 = vld [vmem:[#allocation3 + $0x1000] sm:$0xff]
    %v541 = vld [vmem:[#allocation3 + $0x1008] sm:$0xff]
    %v542 = vld [vmem:[#allocation3 + $0x1010] sm:$0xff]
    %v543 = vld [vmem:[#allocation3 + $0x1018] sm:$0xff]
    %v544 = vld [vmem:[#allocation3 + $0x1020] sm:$0xff]
    %v545 = vld [vmem:[#allocation3 + $0x1028] sm:$0xff]
    %v546 = vld [vmem:[#allocation3 + $0x1030] sm:$0xff]
    %v547 = vld [vmem:[#allocation3 + $0x1038] sm:$0xff]
    %v548 = vstv %s27
    %v549 = vmul.f32 %v28, %v548
    %v550 = vmul.f32 %v29, %v548
    %v551 = vmul.f32 %v30, %v548
    %v552 = vmul.f32 %v31, %v548
    %v553 = vmul.f32 %v32, %v548
    %v554 = vmul.f32 %v33, %v548
    %v555 = vmul.f32 %v34, %v548
    %v556 = vmul.f32 %v35, %v548
    %v557 = vmul.f32 %v36, %v548
    %v558 = vmul.f32 %v37, %v548
    %v559 = vmul.f32 %v38, %v548
    %v560 = vmul.f32 %v39, %v548
    %v561 = vmul.f32 %v40, %v548
    %v562 = vmul.f32 %v41, %v548
    %v563 = vmul.f32 %v42, %v548
    %v564 = vmul.f32 %v43, %v548
    %v565 = vmul.f32 %v44, %v548
    %v566 = vmul.f32 %v45, %v548
    %v567 = vmul.f32 %v46, %v548
    %v568 = vmul.f32 %v47, %v548
    %v569 = vmul.f32 %v48, %v548
    %v570 = vmul.f32 %v49, %v548
    %v571 = vmul.f32 %v50, %v548
    %v572 = vmul.f32 %v51, %v548
    %v573 = vmul.f32 %v52, %v548
    %v574 = vmul.f32 %v53, %v548
    %v575 = vmul.f32 %v54, %v548
    %v576 = vmul.f32 %v55, %v548
    %v577 = vmul.f32 %v56, %v548
    %v578 = vmul.f32 %v57, %v548
    %v579 = vmul.f32 %v58, %v548
    %v580 = vmul.f32 %v59, %v548
    %v581 = vmul.f32 %v60, %v548
    %v582 = vmul.f32 %v61, %v548
    %v583 = vmul.f32 %v62, %v548
    %v584 = vmul.f32 %v63, %v548
    %v585 = vmul.f32 %v64, %v548
    %v586 = vmul.f32 %v65, %v548
    %v587 = vmul.f32 %v66, %v548
    %v588 = vmul.f32 %v67, %v548
    %v589 = vmul.f32 %v68, %v548
    %v590 = vmul.f32 %v69, %v548
    %v591 = vmul.f32 %v70, %v548
    %v592 = vmul.f32 %v71, %v548
    %v593 = vmul.f32 %v72, %v548
    %v594 = vmul.f32 %v73, %v548
    %v595 = vmul.f32 %v74, %v548
    %v596 = vmul.f32 %v75, %v548
    %v597 = vmul.f32 %v76, %v548
    %v598 = vmul.f32 %v77, %v548
    %v599 = vmul.f32 %v78, %v548
    %v600 = vmul.f32 %v79, %v548
    %v601 = vmul.f32 %v80, %v548
    %v602 = vmul.f32 %v81, %v548
    %v603 = vmul.f32 %v82, %v548
    %v604 = vmul.f32 %v83, %v548
    %v605 = vmul.f32 %v84, %v548
    %v606 = vmul.f32 %v85, %v548
    %v607 = vmul.f32 %v86, %v548
    %v608 = vmul.f32 %v87, %v548
    %v609 = vmul.f32 %v88, %v548
    %v610 = vmul.f32 %v89, %v548
    %v611 = vmul.f32 %v90, %v548
    %v612 = vmul.f32 %v91, %v548
    %v613 = vmul.f32 %v92, %v548
    %v614 = vmul.f32 %v93, %v548
    %v615 = vmul.f32 %v94, %v548
    %v616 = vmul.f32 %v95, %v548
    %v617 = vmul.f32 %v96, %v548
    %v618 = vmul.f32 %v97, %v548
    %v619 = vmul.f32 %v98, %v548
    %v620 = vmul.f32 %v99, %v548
    %v621 = vmul.f32 %v100, %v548
    %v622 = vmul.f32 %v101, %v548
    %v623 = vmul.f32 %v102, %v548
    %v624 = vmul.f32 %v103, %v548
    %v625 = vmul.f32 %v104, %v548
    %v626 = vmul.f32 %v105, %v548
    %v627 = vmul.f32 %v106, %v548
    %v628 = vmul.f32 %v107, %v548
    %v629 = vmul.f32 %v108, %v548
    %v630 = vmul.f32 %v109, %v548
    %v631 = vmul.f32 %v110, %v548
    %v632 = vmul.f32 %v111, %v548
    %v633 = vmul.f32 %v112, %v548
    %v634 = vmul.f32 %v113, %v548
    %v635 = vmul.f32 %v114, %v548
    %v636 = vmul.f32 %v115, %v548
    %v637 = vmul.f32 %v116, %v548
    %v638 = vmul.f32 %v117, %v548
    %v639 = vmul.f32 %v118, %v548
    %v640 = vmul.f32 %v119, %v548
    %v641 = vmul.f32 %v120, %v548
    %v642 = vmul.f32 %v121, %v548
    %v643 = vmul.f32 %v122, %v548
    %v644 = vmul.f32 %v123, %v548
    %v645 = vmul.f32 %v124, %v548
    %v646 = vmul.f32 %v125, %v548
    %v647 = vmul.f32 %v126, %v548
    %v648 = vmul.f32 %v127, %v548
    %v649 = vmul.f32 %v128, %v548
    %v650 = vmul.f32 %v129, %v548
    %v651 = vmul.f32 %v130, %v548
    %v652 = vmul.f32 %v131, %v548
    %v653 = vmul.f32 %v132, %v548
    %v654 = vmul.f32 %v133, %v548
    %v655 = vmul.f32 %v134, %v548
    %v656 = vmul.f32 %v135, %v548
    %v657 = vmul.f32 %v136, %v548
    %v658 = vmul.f32 %v137, %v548
    %v659 = vmul.f32 %v138, %v548
    %v660 = vmul.f32 %v139, %v548
    %v661 = vmul.f32 %v140, %v548
    %v662 = vmul.f32 %v141, %v548
    %v663 = vmul.f32 %v142, %v548
    %v664 = vmul.f32 %v143, %v548
    %v665 = vmul.f32 %v144, %v548
    %v666 = vmul.f32 %v145, %v548
    %v667 = vmul.f32 %v146, %v548
    %v668 = vmul.f32 %v147, %v548
    %v669 = vmul.f32 %v148, %v548
    %v670 = vmul.f32 %v149, %v548
    %v671 = vmul.f32 %v150, %v548
    %v672 = vmul.f32 %v151, %v548
    %v673 = vmul.f32 %v152, %v548
    %v674 = vmul.f32 %v153, %v548
    %v675 = vmul.f32 %v154, %v548
    %v676 = vmul.f32 %v155, %v548
    %v677 = vmul.f32 %v156, %v548
    %v678 = vmul.f32 %v157, %v548
    %v679 = vmul.f32 %v158, %v548
    %v680 = vmul.f32 %v159, %v548
    %v681 = vmul.f32 %v160, %v548
    %v682 = vmul.f32 %v161, %v548
    %v683 = vmul.f32 %v162, %v548
    %v684 = vmul.f32 %v163, %v548
    %v685 = vmul.f32 %v164, %v548
    %v686 = vmul.f32 %v165, %v548
    %v687 = vmul.f32 %v166, %v548
    %v688 = vmul.f32 %v167, %v548
    %v689 = vmul.f32 %v168, %v548
    %v690 = vmul.f32 %v169, %v548
    %v691 = vmul.f32 %v170, %v548
    %v692 = vmul.f32 %v171, %v548
    %v693 = vmul.f32 %v172, %v548
    %v694 = vmul.f32 %v173, %v548
    %v695 = vmul.f32 %v174, %v548
    %v696 = vmul.f32 %v175, %v548
    %v697 = vmul.f32 %v176, %v548
    %v698 = vmul.f32 %v177, %v548
    %v699 = vmul.f32 %v178, %v548
    %v700 = vmul.f32 %v179, %v548
    %v701 = vmul.f32 %v180, %v548
    %v702 = vmul.f32 %v181, %v548
    %v703 = vmul.f32 %v182, %v548
    %v704 = vmul.f32 %v183, %v548
    %v705 = vmul.f32 %v184, %v548
    %v706 = vmul.f32 %v185, %v548
    %v707 = vmul.f32 %v186, %v548
    %v708 = vmul.f32 %v187, %v548
    %v709 = vmul.f32 %v188, %v548
    %v710 = vmul.f32 %v189, %v548
    %v711 = vmul.f32 %v190, %v548
    %v712 = vmul.f32 %v191, %v548
    %v713 = vmul.f32 %v192, %v548
    %v714 = vmul.f32 %v193, %v548
    %v715 = vmul.f32 %v194, %v548
    %v716 = vmul.f32 %v195, %v548
    %v717 = vmul.f32 %v196, %v548
    %v718 = vmul.f32 %v197, %v548
    %v719 = vmul.f32 %v198, %v548
    %v720 = vmul.f32 %v199, %v548
    %v721 = vmul.f32 %v200, %v548
    %v722 = vmul.f32 %v201, %v548
    %v723 = vmul.f32 %v202, %v548
    %v724 = vmul.f32 %v203, %v548
    %v725 = vmul.f32 %v204, %v548
    %v726 = vmul.f32 %v205, %v548
    %v727 = vmul.f32 %v206, %v548
    %v728 = vmul.f32 %v207, %v548
    %v729 = vmul.f32 %v208, %v548
    %v730 = vmul.f32 %v209, %v548
    %v731 = vmul.f32 %v210, %v548
    %v732 = vmul.f32 %v211, %v548
    %v733 = vmul.f32 %v212, %v548
    %v734 = vmul.f32 %v213, %v548
    %v735 = vmul.f32 %v214, %v548
    %v736 = vmul.f32 %v215, %v548
    %v737 = vmul.f32 %v216, %v548
    %v738 = vmul.f32 %v217, %v548
    %v739 = vmul.f32 %v218, %v548
    %v740 = vmul.f32 %v219, %v548
    %v741 = vmul.f32 %v220, %v548
    %v742 = vmul.f32 %v221, %v548
    %v743 = vmul.f32 %v222, %v548
    %v744 = vmul.f32 %v223, %v548
    %v745 = vmul.f32 %v224, %v548
    %v746 = vmul.f32 %v225, %v548
    %v747 = vmul.f32 %v226, %v548
    %v748 = vmul.f32 %v227, %v548
    %v749 = vmul.f32 %v228, %v548
    %v750 = vmul.f32 %v229, %v548
    %v751 = vmul.f32 %v230, %v548
    %v752 = vmul.f32 %v231, %v548
    %v753 = vmul.f32 %v232, %v548
    %v754 = vmul.f32 %v233, %v548
    %v755 = vmul.f32 %v234, %v548
    %v756 = vmul.f32 %v235, %v548
    %v757 = vmul.f32 %v236, %v548
    %v758 = vmul.f32 %v237, %v548
    %v759 = vmul.f32 %v238, %v548
    %v760 = vmul.f32 %v239, %v548
    %v761 = vmul.f32 %v240, %v548
    %v762 = vmul.f32 %v241, %v548
    %v763 = vmul.f32 %v242, %v548
    %v764 = vmul.f32 %v243, %v548
    %v765 = vmul.f32 %v244, %v548
    %v766 = vmul.f32 %v245, %v548
    %v767 = vmul.f32 %v246, %v548
    %v768 = vmul.f32 %v247, %v548
    %v769 = vmul.f32 %v248, %v548
    %v770 = vmul.f32 %v249, %v548
    %v771 = vmul.f32 %v250, %v548
    %v772 = vmul.f32 %v251, %v548
    %v773 = vmul.f32 %v252, %v548
    %v774 = vmul.f32 %v253, %v548
    %v775 = vmul.f32 %v254, %v548
    %v776 = vmul.f32 %v255, %v548
    %v777 = vmul.f32 %v256, %v548
    %v778 = vmul.f32 %v257, %v548
    %v779 = vmul.f32 %v258, %v548
    %v780 = vmul.f32 %v259, %v548
    %v781 = vmul.f32 %v260, %v548
    %v782 = vmul.f32 %v261, %v548
    %v783 = vmul.f32 %v262, %v548
    %v784 = vmul.f32 %v263, %v548
    %v785 = vmul.f32 %v264, %v548
    %v786 = vmul.f32 %v265, %v548
    %v787 = vmul.f32 %v266, %v548
    %v788 = vmul.f32 %v267, %v548
    %v789 = vmul.f32 %v268, %v548
    %v790 = vmul.f32 %v269, %v548
    %v791 = vmul.f32 %v270, %v548
    %v792 = vmul.f32 %v271, %v548
    %v793 = vmul.f32 %v272, %v548
    %v794 = vmul.f32 %v273, %v548
    %v795 = vmul.f32 %v274, %v548
    %v796 = vmul.f32 %v275, %v548
    %v797 = vmul.f32 %v276, %v548
    %v798 = vmul.f32 %v277, %v548
    %v799 = vmul.f32 %v278, %v548
    %v800 = vmul.f32 %v279, %v548
    %v801 = vmul.f32 %v280, %v548
    %v802 = vmul.f32 %v281, %v548
    %v803 = vmul.f32 %v282, %v548
    %v804 = vmul.f32 %v283, %v548
    %v805 = vmul.f32 %v284, %v548
    %v806 = vmul.f32 %v285, %v548
    %v807 = vmul.f32 %v286, %v548
    %v808 = vmul.f32 %v287, %v548
    %v809 = vmul.f32 %v288, %v548
    %v810 = vmul.f32 %v289, %v548
    %v811 = vmul.f32 %v290, %v548
    %v812 = vmul.f32 %v291, %v548
    %v813 = vmul.f32 %v292, %v548
    %v814 = vmul.f32 %v293, %v548
    %v815 = vmul.f32 %v294, %v548
    %v816 = vmul.f32 %v295, %v548
    %v817 = vmul.f32 %v296, %v548
    %v818 = vmul.f32 %v297, %v548
    %v819 = vmul.f32 %v298, %v548
    %v820 = vmul.f32 %v299, %v548
    %v821 = vmul.f32 %v300, %v548
    %v822 = vmul.f32 %v301, %v548
    %v823 = vmul.f32 %v302, %v548
    %v824 = vmul.f32 %v303, %v548
    %v825 = vmul.f32 %v304, %v548
    %v826 = vmul.f32 %v305, %v548
    %v827 = vmul.f32 %v306, %v548
    %v828 = vmul.f32 %v307, %v548
    %v829 = vmul.f32 %v308, %v548
    %v830 = vmul.f32 %v309, %v548
    %v831 = vmul.f32 %v310, %v548
    %v832 = vmul.f32 %v311, %v548
    %v833 = vmul.f32 %v312, %v548
    %v834 = vmul.f32 %v313, %v548
    %v835 = vmul.f32 %v314, %v548
    %v836 = vmul.f32 %v315, %v548
    %v837 = vmul.f32 %v316, %v548
    %v838 = vmul.f32 %v317, %v548
    %v839 = vmul.f32 %v318, %v548
    %v840 = vmul.f32 %v319, %v548
    %v841 = vmul.f32 %v320, %v548
    %v842 = vmul.f32 %v321, %v548
    %v843 = vmul.f32 %v322, %v548
    %v844 = vmul.f32 %v323, %v548
    %v845 = vmul.f32 %v324, %v548
    %v846 = vmul.f32 %v325, %v548
    %v847 = vmul.f32 %v326, %v548
    %v848 = vmul.f32 %v327, %v548
    %v849 = vmul.f32 %v328, %v548
    %v850 = vmul.f32 %v329, %v548
    %v851 = vmul.f32 %v330, %v548
    %v852 = vmul.f32 %v331, %v548
    %v853 = vmul.f32 %v332, %v548
    %v854 = vmul.f32 %v333, %v548
    %v855 = vmul.f32 %v334, %v548
    %v856 = vmul.f32 %v335, %v548
    %v857 = vmul.f32 %v336, %v548
    %v858 = vmul.f32 %v337, %v548
    %v859 = vmul.f32 %v338, %v548
    %v860 = vmul.f32 %v339, %v548
    %v861 = vmul.f32 %v340, %v548
    %v862 = vmul.f32 %v341, %v548
    %v863 = vmul.f32 %v342, %v548
    %v864 = vmul.f32 %v343, %v548
    %v865 = vmul.f32 %v344, %v548
    %v866 = vmul.f32 %v345, %v548
    %v867 = vmul.f32 %v346, %v548
    %v868 = vmul.f32 %v347, %v548
    %v869 = vmul.f32 %v348, %v548
    %v870 = vmul.f32 %v349, %v548
    %v871 = vmul.f32 %v350, %v548
    %v872 = vmul.f32 %v351, %v548
    %v873 = vmul.f32 %v352, %v548
    %v874 = vmul.f32 %v353, %v548
    %v875 = vmul.f32 %v354, %v548
    %v876 = vmul.f32 %v355, %v548
    %v877 = vmul.f32 %v356, %v548
    %v878 = vmul.f32 %v357, %v548
    %v879 = vmul.f32 %v358, %v548
    %v880 = vmul.f32 %v359, %v548
    %v881 = vmul.f32 %v360, %v548
    %v882 = vmul.f32 %v361, %v548
    %v883 = vmul.f32 %v362, %v548
    %v884 = vmul.f32 %v363, %v548
    %v885 = vmul.f32 %v364, %v548
    %v886 = vmul.f32 %v365, %v548
    %v887 = vmul.f32 %v366, %v548
    %v888 = vmul.f32 %v367, %v548
    %v889 = vmul.f32 %v368, %v548
    %v890 = vmul.f32 %v369, %v548
    %v891 = vmul.f32 %v370, %v548
    %v892 = vmul.f32 %v371, %v548
    %v893 = vmul.f32 %v372, %v548
    %v894 = vmul.f32 %v373, %v548
    %v895 = vmul.f32 %v374, %v548
    %v896 = vmul.f32 %v375, %v548
    %v897 = vmul.f32 %v376, %v548
    %v898 = vmul.f32 %v377, %v548
    %v899 = vmul.f32 %v378, %v548
    %v900 = vmul.f32 %v379, %v548
    %v901 = vmul.f32 %v380, %v548
    %v902 = vmul.f32 %v381, %v548
    %v903 = vmul.f32 %v382, %v548
    %v904 = vmul.f32 %v383, %v548
    %v905 = vmul.f32 %v384, %v548
    %v906 = vmul.f32 %v385, %v548
    %v907 = vmul.f32 %v386, %v548
    %v908 = vmul.f32 %v387, %v548
    %v909 = vmul.f32 %v388, %v548
    %v910 = vmul.f32 %v389, %v548
    %v911 = vmul.f32 %v390, %v548
    %v912 = vmul.f32 %v391, %v548
    %v913 = vmul.f32 %v392, %v548
    %v914 = vmul.f32 %v393, %v548
    %v915 = vmul.f32 %v394, %v548
    %v916 = vmul.f32 %v395, %v548
    %v917 = vmul.f32 %v396, %v548
    %v918 = vmul.f32 %v397, %v548
    %v919 = vmul.f32 %v398, %v548
    %v920 = vmul.f32 %v399, %v548
    %v921 = vmul.f32 %v400, %v548
    %v922 = vmul.f32 %v401, %v548
    %v923 = vmul.f32 %v402, %v548
    %v924 = vmul.f32 %v403, %v548
    %v925 = vmul.f32 %v404, %v548
    %v926 = vmul.f32 %v405, %v548
    %v927 = vmul.f32 %v406, %v548
    %v928 = vmul.f32 %v407, %v548
    %v929 = vmul.f32 %v408, %v548
    %v930 = vmul.f32 %v409, %v548
    %v931 = vmul.f32 %v410, %v548
    %v932 = vmul.f32 %v411, %v548
    %v933 = vmul.f32 %v412, %v548
    %v934 = vmul.f32 %v413, %v548
    %v935 = vmul.f32 %v414, %v548
    %v936 = vmul.f32 %v415, %v548
    %v937 = vmul.f32 %v416, %v548
    %v938 = vmul.f32 %v417, %v548
    %v939 = vmul.f32 %v418, %v548
    %v940 = vmul.f32 %v419, %v548
    %v941 = vmul.f32 %v420, %v548
    %v942 = vmul.f32 %v421, %v548
    %v943 = vmul.f32 %v422, %v548
    %v944 = vmul.f32 %v423, %v548
    %v945 = vmul.f32 %v424, %v548
    %v946 = vmul.f32 %v425, %v548
    %v947 = vmul.f32 %v426, %v548
    %v948 = vmul.f32 %v427, %v548
    %v949 = vmul.f32 %v428, %v548
    %v950 = vmul.f32 %v429, %v548
    %v951 = vmul.f32 %v430, %v548
    %v952 = vmul.f32 %v431, %v548
    %v953 = vmul.f32 %v432, %v548
    %v954 = vmul.f32 %v433, %v548
    %v955 = vmul.f32 %v434, %v548
    %v956 = vmul.f32 %v435, %v548
    %v957 = vmul.f32 %v436, %v548
    %v958 = vmul.f32 %v437, %v548
    %v959 = vmul.f32 %v438, %v548
    %v960 = vmul.f32 %v439, %v548
    %v961 = vmul.f32 %v440, %v548
    %v962 = vmul.f32 %v441, %v548
    %v963 = vmul.f32 %v442, %v548
    %v964 = vmul.f32 %v443, %v548
    %v965 = vmul.f32 %v444, %v548
    %v966 = vmul.f32 %v445, %v548
    %v967 = vmul.f32 %v446, %v548
    %v968 = vmul.f32 %v447, %v548
    %v969 = vmul.f32 %v448, %v548
    %v970 = vmul.f32 %v449, %v548
    %v971 = vmul.f32 %v450, %v548
    %v972 = vmul.f32 %v451, %v548
    %v973 = vmul.f32 %v452, %v548
    %v974 = vmul.f32 %v453, %v548
    %v975 = vmul.f32 %v454, %v548
    %v976 = vmul.f32 %v455, %v548
    %v977 = vmul.f32 %v456, %v548
    %v978 = vmul.f32 %v457, %v548
    %v979 = vmul.f32 %v458, %v548
    %v980 = vmul.f32 %v459, %v548
    %v981 = vmul.f32 %v460, %v548
    %v982 = vmul.f32 %v461, %v548
    %v983 = vmul.f32 %v462, %v548
    %v984 = vmul.f32 %v463, %v548
    %v985 = vmul.f32 %v464, %v548
    %v986 = vmul.f32 %v465, %v548
    %v987 = vmul.f32 %v466, %v548
    %v988 = vmul.f32 %v467, %v548
    %v989 = vmul.f32 %v468, %v548
    %v990 = vmul.f32 %v469, %v548
    %v991 = vmul.f32 %v470, %v548
    %v992 = vmul.f32 %v471, %v548
    %v993 = vmul.f32 %v472, %v548
    %v994 = vmul.f32 %v473, %v548
    %v995 = vmul.f32 %v474, %v548
    %v996 = vmul.f32 %v475, %v548
    %v997 = vmul.f32 %v476, %v548
    %v998 = vmul.f32 %v477, %v548
    %v999 = vmul.f32 %v478, %v548
    %v1000 = vmul.f32 %v479, %v548
    %v1001 = vmul.f32 %v480, %v548
    %v1002 = vmul.f32 %v481, %v548
    %v1003 = vmul.f32 %v482, %v548
    %v1004 = vmul.f32 %v483, %v548
    %v1005 = vmul.f32 %v484, %v548
    %v1006 = vmul.f32 %v485, %v548
    %v1007 = vmul.f32 %v486, %v548
    %v1008 = vmul.f32 %v487, %v548
    %v1009 = vmul.f32 %v488, %v548
    %v1010 = vmul.f32 %v489, %v548
    %v1011 = vmul.f32 %v490, %v548
    %v1012 = vmul.f32 %v491, %v548
    %v1013 = vmul.f32 %v492, %v548
    %v1014 = vmul.f32 %v493, %v548
    %v1015 = vmul.f32 %v494, %v548
    %v1016 = vmul.f32 %v495, %v548
    %v1017 = vmul.f32 %v496, %v548
    %v1018 = vmul.f32 %v497, %v548
    %v1019 = vmul.f32 %v498, %v548
    %v1020 = vmul.f32 %v499, %v548
    %v1021 = vmul.f32 %v500, %v548
    %v1022 = vmul.f32 %v501, %v548
    %v1023 = vmul.f32 %v502, %v548
    %v1024 = vmul.f32 %v503, %v548
    %v1025 = vmul.f32 %v504, %v548
    %v1026 = vmul.f32 %v505, %v548
    %v1027 = vmul.f32 %v506, %v548
    %v1028 = vmul.f32 %v507, %v548
    %v1029 = vmul.f32 %v508, %v548
    %v1030 = vmul.f32 %v509, %v548
    %v1031 = vmul.f32 %v510, %v548
    %v1032 = vmul.f32 %v511, %v548
    %v1033 = vmul.f32 %v512, %v548
    %v1034 = vmul.f32 %v513, %v548
    %v1035 = vmul.f32 %v514, %v548
    %v1036 = vmul.f32 %v515, %v548
    %v1037 = vmul.f32 %v516, %v548
    %v1038 = vmul.f32 %v517, %v548
    %v1039 = vmul.f32 %v518, %v548
    %v1040 = vmul.f32 %v519, %v548
    %v1041 = vmul.f32 %v520, %v548
    %v1042 = vmul.f32 %v521, %v548
    %v1043 = vmul.f32 %v522, %v548
    %v1044 = vmul.f32 %v523, %v548
    %v1045 = vmul.f32 %v524, %v548
    %v1046 = vmul.f32 %v525, %v548
    %v1047 = vmul.f32 %v526, %v548
    %v1048 = vmul.f32 %v527, %v548
    %v1049 = vmul.f32 %v528, %v548
    %v1050 = vmul.f32 %v529, %v548
    %v1051 = vmul.f32 %v530, %v548
    %v1052 = vmul.f32 %v531, %v548
    %v1053 = vmul.f32 %v532, %v548
    %v1054 = vmul.f32 %v533, %v548
    %v1055 = vmul.f32 %v534, %v548
    %v1056 = vmul.f32 %v535, %v548
    %v1057 = vmul.f32 %v536, %v548
    %v1058 = vmul.f32 %v537, %v548
    %v1059 = vmul.f32 %v538, %v548
    %v1060 = vmul.f32 %v539, %v548
    %v1061 = vmul.f32 %v540, %v548
    %v1062 = vmul.f32 %v541, %v548
    %v1063 = vmul.f32 %v542, %v548
    %v1064 = vmul.f32 %v543, %v548
    %v1065 = vmul.f32 %v544, %v548
    %v1066 = vmul.f32 %v545, %v548
    %v1067 = vmul.f32 %v546, %v548
    %v1068 = vmul.f32 %v547, %v548
    %1069 = vst [vmem:[#allocation6] sm:$0xff] %v549
    %1070 = vst [vmem:[#allocation6 + $0x8] sm:$0xff] %v550
    %1071 = vst [vmem:[#allocation6 + $0x10] sm:$0xff] %v551
    %1072 = vst [vmem:[#allocation6 + $0x18] sm:$0xff] %v552
    %1073 = vst [vmem:[#allocation6 + $0x20] sm:$0xff] %v553
    %1074 = vst [vmem:[#allocation6 + $0x28] sm:$0xff] %v554
    %1075 = vst [vmem:[#allocation6 + $0x30] sm:$0xff] %v555
    %1076 = vst [vmem:[#allocation6 + $0x38] sm:$0xff] %v556
    %1077 = vst [vmem:[#allocation6 + $0x40] sm:$0xff] %v557
    %1078 = vst [vmem:[#allocation6 + $0x48] sm:$0xff] %v558
    %1079 = vst [vmem:[#allocation6 + $0x50] sm:$0xff] %v559
    %1080 = vst [vmem:[#allocation6 + $0x58] sm:$0xff] %v560
    %1081 = vst [vmem:[#allocation6 + $0x60] sm:$0xff] %v561
    %1082 = vst [vmem:[#allocation6 + $0x68] sm:$0xff] %v562
    %1083 = vst [vmem:[#allocation6 + $0x70] sm:$0xff] %v563
    %1084 = vst [vmem:[#allocation6 + $0x78] sm:$0xff] %v564
    %1085 = vst [vmem:[#allocation6 + $0x80] sm:$0xff] %v565
    %1086 = vst [vmem:[#allocation6 + $0x88] sm:$0xff] %v566
    %1087 = vst [vmem:[#allocation6 + $0x90] sm:$0xff] %v567
    %1088 = vst [vmem:[#allocation6 + $0x98] sm:$0xff] %v568
    %1089 = vst [vmem:[#allocation6 + $0xa0] sm:$0xff] %v569
    %1090 = vst [vmem:[#allocation6 + $0xa8] sm:$0xff] %v570
    %1091 = vst [vmem:[#allocation6 + $0xb0] sm:$0xff] %v571
    %1092 = vst [vmem:[#allocation6 + $0xb8] sm:$0xff] %v572
    %1093 = vst [vmem:[#allocation6 + $0xc0] sm:$0xff] %v573
    %1094 = vst [vmem:[#allocation6 + $0xc8] sm:$0xff] %v574
    %1095 = vst [vmem:[#allocation6 + $0xd0] sm:$0xff] %v575
    %1096 = vst [vmem:[#allocation6 + $0xd8] sm:$0xff] %v576
    %1097 = vst [vmem:[#allocation6 + $0xe0] sm:$0xff] %v577
    %1098 = vst [vmem:[#allocation6 + $0xe8] sm:$0xff] %v578
    %1099 = vst [vmem:[#allocation6 + $0xf0] sm:$0xff] %v579
    %1100 = vst [vmem:[#allocation6 + $0xf8] sm:$0xff] %v580
    %1101 = vst [vmem:[#allocation6 + $0x100] sm:$0xff] %v581
    %1102 = vst [vmem:[#allocation6 + $0x108] sm:$0xff] %v582
    %1103 = vst [vmem:[#allocation6 + $0x110] sm:$0xff] %v583
    %1104 = vst [vmem:[#allocation6 + $0x118] sm:$0xff] %v584
    %1105 = vst [vmem:[#allocation6 + $0x120] sm:$0xff] %v585
    %1106 = vst [vmem:[#allocation6 + $0x128] sm:$0xff] %v586
    %1107 = vst [vmem:[#allocation6 + $0x130] sm:$0xff] %v587
    %1108 = vst [vmem:[#allocation6 + $0x138] sm:$0xff] %v588
    %1109 = vst [vmem:[#allocation6 + $0x140] sm:$0xff] %v589
    %1110 = vst [vmem:[#allocation6 + $0x148] sm:$0xff] %v590
    %1111 = vst [vmem:[#allocation6 + $0x150] sm:$0xff] %v591
    %1112 = vst [vmem:[#allocation6 + $0x158] sm:$0xff] %v592
    %1113 = vst [vmem:[#allocation6 + $0x160] sm:$0xff] %v593
    %1114 = vst [vmem:[#allocation6 + $0x168] sm:$0xff] %v594
    %1115 = vst [vmem:[#allocation6 + $0x170] sm:$0xff] %v595
    %1116 = vst [vmem:[#allocation6 + $0x178] sm:$0xff] %v596
    %1117 = vst [vmem:[#allocation6 + $0x180] sm:$0xff] %v597
    %1118 = vst [vmem:[#allocation6 + $0x188] sm:$0xff] %v598
    %1119 = vst [vmem:[#allocation6 + $0x190] sm:$0xff] %v599
    %1120 = vst [vmem:[#allocation6 + $0x198] sm:$0xff] %v600
    %1121 = vst [vmem:[#allocation6 + $0x1a0] sm:$0xff] %v601
    %1122 = vst [vmem:[#allocation6 + $0x1a8] sm:$0xff] %v602
    %1123 = vst [vmem:[#allocation6 + $0x1b0] sm:$0xff] %v603
    %1124 = vst [vmem:[#allocation6 + $0x1b8] sm:$0xff] %v604
    %1125 = vst [vmem:[#allocation6 + $0x1c0] sm:$0xff] %v605
    %1126 = vst [vmem:[#allocation6 + $0x1c8] sm:$0xff] %v606
    %1127 = vst [vmem:[#allocation6 + $0x1d0] sm:$0xff] %v607
    %1128 = vst [vmem:[#allocation6 + $0x1d8] sm:$0xff] %v608
    %1129 = vst [vmem:[#allocation6 + $0x1e0] sm:$0xff] %v609
    %1130 = vst [vmem:[#allocation6 + $0x1e8] sm:$0xff] %v610
    %1131 = vst [vmem:[#allocation6 + $0x1f0] sm:$0xff] %v611
    %1132 = vst [vmem:[#allocation6 + $0x1f8] sm:$0xff] %v612
    %1133 = vst [vmem:[#allocation6 + $0x200] sm:$0xff] %v613
    %1134 = vst [vmem:[#allocation6 + $0x208] sm:$0xff] %v614
    %1135 = vst [vmem:[#allocation6 + $0x210] sm:$0xff] %v615
    %1136 = vst [vmem:[#allocation6 + $0x218] sm:$0xff] %v616
    %1137 = vst [vmem:[#allocation6 + $0x220] sm:$0xff] %v617
    %1138 = vst [vmem:[#allocation6 + $0x228] sm:$0xff] %v618
    %1139 = vst [vmem:[#allocation6 + $0x230] sm:$0xff] %v619
    %1140 = vst [vmem:[#allocation6 + $0x238] sm:$0xff] %v620
    %1141 = vst [vmem:[#allocation6 + $0x240] sm:$0xff] %v621
    %1142 = vst [vmem:[#allocation6 + $0x248] sm:$0xff] %v622
    %1143 = vst [vmem:[#allocation6 + $0x250] sm:$0xff] %v623
    %1144 = vst [vmem:[#allocation6 + $0x258] sm:$0xff] %v624
    %1145 = vst [vmem:[#allocation6 + $0x260] sm:$0xff] %v625
    %1146 = vst [vmem:[#allocation6 + $0x268] sm:$0xff] %v626
    %1147 = vst [vmem:[#allocation6 + $0x270] sm:$0xff] %v627
    %1148 = vst [vmem:[#allocation6 + $0x278] sm:$0xff] %v628
    %1149 = vst [vmem:[#allocation6 + $0x280] sm:$0xff] %v629
    %1150 = vst [vmem:[#allocation6 + $0x288] sm:$0xff] %v630
    %1151 = vst [vmem:[#allocation6 + $0x290] sm:$0xff] %v631
    %1152 = vst [vmem:[#allocation6 + $0x298] sm:$0xff] %v632
    %1153 = vst [vmem:[#allocation6 + $0x2a0] sm:$0xff] %v633
    %1154 = vst [vmem:[#allocation6 + $0x2a8] sm:$0xff] %v634
    %1155 = vst [vmem:[#allocation6 + $0x2b0] sm:$0xff] %v635
    %1156 = vst [vmem:[#allocation6 + $0x2b8] sm:$0xff] %v636
    %1157 = vst [vmem:[#allocation6 + $0x2c0] sm:$0xff] %v637
    %1158 = vst [vmem:[#allocation6 + $0x2c8] sm:$0xff] %v638
    %1159 = vst [vmem:[#allocation6 + $0x2d0] sm:$0xff] %v639
    %1160 = vst [vmem:[#allocation6 + $0x2d8] sm:$0xff] %v640
    %1161 = vst [vmem:[#allocation6 + $0x2e0] sm:$0xff] %v641
    %1162 = vst [vmem:[#allocation6 + $0x2e8] sm:$0xff] %v642
    %1163 = vst [vmem:[#allocation6 + $0x2f0] sm:$0xff] %v643
    %1164 = vst [vmem:[#allocation6 + $0x2f8] sm:$0xff] %v644
    %1165 = vst [vmem:[#allocation6 + $0x300] sm:$0xff] %v645
    %1166 = vst [vmem:[#allocation6 + $0x308] sm:$0xff] %v646
    %1167 = vst [vmem:[#allocation6 + $0x310] sm:$0xff] %v647
    %1168 = vst [vmem:[#allocation6 + $0x318] sm:$0xff] %v648
    %1169 = vst [vmem:[#allocation6 + $0x320] sm:$0xff] %v649
    %1170 = vst [vmem:[#allocation6 + $0x328] sm:$0xff] %v650
    %1171 = vst [vmem:[#allocation6 + $0x330] sm:$0xff] %v651
    %1172 = vst [vmem:[#allocation6 + $0x338] sm:$0xff] %v652
    %1173 = vst [vmem:[#allocation6 + $0x340] sm:$0xff] %v653
    %1174 = vst [vmem:[#allocation6 + $0x348] sm:$0xff] %v654
    %1175 = vst [vmem:[#allocation6 + $0x350] sm:$0xff] %v655
    %1176 = vst [vmem:[#allocation6 + $0x358] sm:$0xff] %v656
    %1177 = vst [vmem:[#allocation6 + $0x360] sm:$0xff] %v657
    %1178 = vst [vmem:[#allocation6 + $0x368] sm:$0xff] %v658
    %1179 = vst [vmem:[#allocation6 + $0x370] sm:$0xff] %v659
    %1180 = vst [vmem:[#allocation6 + $0x378] sm:$0xff] %v660
    %1181 = vst [vmem:[#allocation6 + $0x380] sm:$0xff] %v661
    %1182 = vst [vmem:[#allocation6 + $0x388] sm:$0xff] %v662
    %1183 = vst [vmem:[#allocation6 + $0x390] sm:$0xff] %v663
    %1184 = vst [vmem:[#allocation6 + $0x398] sm:$0xff] %v664
    %1185 = vst [vmem:[#allocation6 + $0x3a0] sm:$0xff] %v665
    %1186 = vst [vmem:[#allocation6 + $0x3a8] sm:$0xff] %v666
    %1187 = vst [vmem:[#allocation6 + $0x3b0] sm:$0xff] %v667
    %1188 = vst [vmem:[#allocation6 + $0x3b8] sm:$0xff] %v668
    %1189 = vst [vmem:[#allocation6 + $0x3c0] sm:$0xff] %v669
    %1190 = vst [vmem:[#allocation6 + $0x3c8] sm:$0xff] %v670
    %1191 = vst [vmem:[#allocation6 + $0x3d0] sm:$0xff] %v671
    %1192 = vst [vmem:[#allocation6 + $0x3d8] sm:$0xff] %v672
    %1193 = vst [vmem:[#allocation6 + $0x3e0] sm:$0xff] %v673
    %1194 = vst [vmem:[#allocation6 + $0x3e8] sm:$0xff] %v674
    %1195 = vst [vmem:[#allocation6 + $0x3f0] sm:$0xff] %v675
    %1196 = vst [vmem:[#allocation6 + $0x3f8] sm:$0xff] %v676
    %1197 = vst [vmem:[#allocation6 + $0x400] sm:$0xff] %v677
    %1198 = vst [vmem:[#allocation6 + $0x408] sm:$0xff] %v678
    %1199 = vst [vmem:[#allocation6 + $0x410] sm:$0xff] %v679
    %1200 = vst [vmem:[#allocation6 + $0x418] sm:$0xff] %v680
    %1201 = vst [vmem:[#allocation6 + $0x420] sm:$0xff] %v681
    %1202 = vst [vmem:[#allocation6 + $0x428] sm:$0xff] %v682
    %1203 = vst [vmem:[#allocation6 + $0x430] sm:$0xff] %v683
    %1204 = vst [vmem:[#allocation6 + $0x438] sm:$0xff] %v684
    %1205 = vst [vmem:[#allocation6 + $0x440] sm:$0xff] %v685
    %1206 = vst [vmem:[#allocation6 + $0x448] sm:$0xff] %v686
    %1207 = vst [vmem:[#allocation6 + $0x450] sm:$0xff] %v687
    %1208 = vst [vmem:[#allocation6 + $0x458] sm:$0xff] %v688
    %1209 = vst [vmem:[#allocation6 + $0x460] sm:$0xff] %v689
    %1210 = vst [vmem:[#allocation6 + $0x468] sm:$0xff] %v690
    %1211 = vst [vmem:[#allocation6 + $0x470] sm:$0xff] %v691
    %1212 = vst [vmem:[#allocation6 + $0x478] sm:$0xff] %v692
    %1213 = vst [vmem:[#allocation6 + $0x480] sm:$0xff] %v693
    %1214 = vst [vmem:[#allocation6 + $0x488] sm:$0xff] %v694
    %1215 = vst [vmem:[#allocation6 + $0x490] sm:$0xff] %v695
    %1216 = vst [vmem:[#allocation6 + $0x498] sm:$0xff] %v696
    %1217 = vst [vmem:[#allocation6 + $0x4a0] sm:$0xff] %v697
    %1218 = vst [vmem:[#allocation6 + $0x4a8] sm:$0xff] %v698
    %1219 = vst [vmem:[#allocation6 + $0x4b0] sm:$0xff] %v699
    %1220 = vst [vmem:[#allocation6 + $0x4b8] sm:$0xff] %v700
    %1221 = vst [vmem:[#allocation6 + $0x4c0] sm:$0xff] %v701
    %1222 = vst [vmem:[#allocation6 + $0x4c8] sm:$0xff] %v702
    %1223 = vst [vmem:[#allocation6 + $0x4d0] sm:$0xff] %v703
    %1224 = vst [vmem:[#allocation6 + $0x4d8] sm:$0xff] %v704
    %1225 = vst [vmem:[#allocation6 + $0x4e0] sm:$0xff] %v705
    %1226 = vst [vmem:[#allocation6 + $0x4e8] sm:$0xff] %v706
    %1227 = vst [vmem:[#allocation6 + $0x4f0] sm:$0xff] %v707
    %1228 = vst [vmem:[#allocation6 + $0x4f8] sm:$0xff] %v708
    %1229 = vst [vmem:[#allocation6 + $0x500] sm:$0xff] %v709
    %1230 = vst [vmem:[#allocation6 + $0x508] sm:$0xff] %v710
    %1231 = vst [vmem:[#allocation6 + $0x510] sm:$0xff] %v711
    %1232 = vst [vmem:[#allocation6 + $0x518] sm:$0xff] %v712
    %1233 = vst [vmem:[#allocation6 + $0x520] sm:$0xff] %v713
    %1234 = vst [vmem:[#allocation6 + $0x528] sm:$0xff] %v714
    %1235 = vst [vmem:[#allocation6 + $0x530] sm:$0xff] %v715
    %1236 = vst [vmem:[#allocation6 + $0x538] sm:$0xff] %v716
    %1237 = vst [vmem:[#allocation6 + $0x540] sm:$0xff] %v717
    %1238 = vst [vmem:[#allocation6 + $0x548] sm:$0xff] %v718
    %1239 = vst [vmem:[#allocation6 + $0x550] sm:$0xff] %v719
    %1240 = vst [vmem:[#allocation6 + $0x558] sm:$0xff] %v720
    %1241 = vst [vmem:[#allocation6 + $0x560] sm:$0xff] %v721
    %1242 = vst [vmem:[#allocation6 + $0x568] sm:$0xff] %v722
    %1243 = vst [vmem:[#allocation6 + $0x570] sm:$0xff] %v723
    %1244 = vst [vmem:[#allocation6 + $0x578] sm:$0xff] %v724
    %1245 = vst [vmem:[#allocation6 + $0x580] sm:$0xff] %v725
    %1246 = vst [vmem:[#allocation6 + $0x588] sm:$0xff] %v726
    %1247 = vst [vmem:[#allocation6 + $0x590] sm:$0xff] %v727
    %1248 = vst [vmem:[#allocation6 + $0x598] sm:$0xff] %v728
    %1249 = vst [vmem:[#allocation6 + $0x5a0] sm:$0xff] %v729
    %1250 = vst [vmem:[#allocation6 + $0x5a8] sm:$0xff] %v730
    %1251 = vst [vmem:[#allocation6 + $0x5b0] sm:$0xff] %v731
    %1252 = vst [vmem:[#allocation6 + $0x5b8] sm:$0xff] %v732
    %1253 = vst [vmem:[#allocation6 + $0x5c0] sm:$0xff] %v733
    %1254 = vst [vmem:[#allocation6 + $0x5c8] sm:$0xff] %v734
    %1255 = vst [vmem:[#allocation6 + $0x5d0] sm:$0xff] %v735
    %1256 = vst [vmem:[#allocation6 + $0x5d8] sm:$0xff] %v736
    %1257 = vst [vmem:[#allocation6 + $0x5e0] sm:$0xff] %v737
    %1258 = vst [vmem:[#allocation6 + $0x5e8] sm:$0xff] %v738
    %1259 = vst [vmem:[#allocation6 + $0x5f0] sm:$0xff] %v739
    %1260 = vst [vmem:[#allocation6 + $0x5f8] sm:$0xff] %v740
    %1261 = vst [vmem:[#allocation6 + $0x600] sm:$0xff] %v741
    %1262 = vst [vmem:[#allocation6 + $0x608] sm:$0xff] %v742
    %1263 = vst [vmem:[#allocation6 + $0x610] sm:$0xff] %v743
    %1264 = vst [vmem:[#allocation6 + $0x618] sm:$0xff] %v744
    %1265 = vst [vmem:[#allocation6 + $0x620] sm:$0xff] %v745
    %1266 = vst [vmem:[#allocation6 + $0x628] sm:$0xff] %v746
    %1267 = vst [vmem:[#allocation6 + $0x630] sm:$0xff] %v747
    %1268 = vst [vmem:[#allocation6 + $0x638] sm:$0xff] %v748
    %1269 = vst [vmem:[#allocation6 + $0x640] sm:$0xff] %v749
    %1270 = vst [vmem:[#allocation6 + $0x648] sm:$0xff] %v750
    %1271 = vst [vmem:[#allocation6 + $0x650] sm:$0xff] %v751
    %1272 = vst [vmem:[#allocation6 + $0x658] sm:$0xff] %v752
    %1273 = vst [vmem:[#allocation6 + $0x660] sm:$0xff] %v753
    %1274 = vst [vmem:[#allocation6 + $0x668] sm:$0xff] %v754
    %1275 = vst [vmem:[#allocation6 + $0x670] sm:$0xff] %v755
    %1276 = vst [vmem:[#allocation6 + $0x678] sm:$0xff] %v756
    %1277 = vst [vmem:[#allocation6 + $0x680] sm:$0xff] %v757
    %1278 = vst [vmem:[#allocation6 + $0x688] sm:$0xff] %v758
    %1279 = vst [vmem:[#allocation6 + $0x690] sm:$0xff] %v759
    %1280 = vst [vmem:[#allocation6 + $0x698] sm:$0xff] %v760
    %1281 = vst [vmem:[#allocation6 + $0x6a0] sm:$0xff] %v761
    %1282 = vst [vmem:[#allocation6 + $0x6a8] sm:$0xff] %v762
    %1283 = vst [vmem:[#allocation6 + $0x6b0] sm:$0xff] %v763
    %1284 = vst [vmem:[#allocation6 + $0x6b8] sm:$0xff] %v764
    %1285 = vst [vmem:[#allocation6 + $0x6c0] sm:$0xff] %v765
    %1286 = vst [vmem:[#allocation6 + $0x6c8] sm:$0xff] %v766
    %1287 = vst [vmem:[#allocation6 + $0x6d0] sm:$0xff] %v767
    %1288 = vst [vmem:[#allocation6 + $0x6d8] sm:$0xff] %v768
    %1289 = vst [vmem:[#allocation6 + $0x6e0] sm:$0xff] %v769
    %1290 = vst [vmem:[#allocation6 + $0x6e8] sm:$0xff] %v770
    %1291 = vst [vmem:[#allocation6 + $0x6f0] sm:$0xff] %v771
    %1292 = vst [vmem:[#allocation6 + $0x6f8] sm:$0xff] %v772
    %1293 = vst [vmem:[#allocation6 + $0x700] sm:$0xff] %v773
    %1294 = vst [vmem:[#allocation6 + $0x708] sm:$0xff] %v774
    %1295 = vst [vmem:[#allocation6 + $0x710] sm:$0xff] %v775
    %1296 = vst [vmem:[#allocation6 + $0x718] sm:$0xff] %v776
    %1297 = vst [vmem:[#allocation6 + $0x720] sm:$0xff] %v777
    %1298 = vst [vmem:[#allocation6 + $0x728] sm:$0xff] %v778
    %1299 = vst [vmem:[#allocation6 + $0x730] sm:$0xff] %v779
    %1300 = vst [vmem:[#allocation6 + $0x738] sm:$0xff] %v780
    %1301 = vst [vmem:[#allocation6 + $0x740] sm:$0xff] %v781
    %1302 = vst [vmem:[#allocation6 + $0x748] sm:$0xff] %v782
    %1303 = vst [vmem:[#allocation6 + $0x750] sm:$0xff] %v783
    %1304 = vst [vmem:[#allocation6 + $0x758] sm:$0xff] %v784
    %1305 = vst [vmem:[#allocation6 + $0x760] sm:$0xff] %v785
    %1306 = vst [vmem:[#allocation6 + $0x768] sm:$0xff] %v786
    %1307 = vst [vmem:[#allocation6 + $0x770] sm:$0xff] %v787
    %1308 = vst [vmem:[#allocation6 + $0x778] sm:$0xff] %v788
    %1309 = vst [vmem:[#allocation6 + $0x780] sm:$0xff] %v789
    %1310 = vst [vmem:[#allocation6 + $0x788] sm:$0xff] %v790
    %1311 = vst [vmem:[#allocation6 + $0x790] sm:$0xff] %v791
    %1312 = vst [vmem:[#allocation6 + $0x798] sm:$0xff] %v792
    %1313 = vst [vmem:[#allocation6 + $0x7a0] sm:$0xff] %v793
    %1314 = vst [vmem:[#allocation6 + $0x7a8] sm:$0xff] %v794
    %1315 = vst [vmem:[#allocation6 + $0x7b0] sm:$0xff] %v795
    %1316 = vst [vmem:[#allocation6 + $0x7b8] sm:$0xff] %v796
    %1317 = vst [vmem:[#allocation6 + $0x7c0] sm:$0xff] %v797
    %1318 = vst [vmem:[#allocation6 + $0x7c8] sm:$0xff] %v798
    %1319 = vst [vmem:[#allocation6 + $0x7d0] sm:$0xff] %v799
    %1320 = vst [vmem:[#allocation6 + $0x7d8] sm:$0xff] %v800
    %1321 = vst [vmem:[#allocation6 + $0x7e0] sm:$0xff] %v801
    %1322 = vst [vmem:[#allocation6 + $0x7e8] sm:$0xff] %v802
    %1323 = vst [vmem:[#allocation6 + $0x7f0] sm:$0xff] %v803
    %1324 = vst [vmem:[#allocation6 + $0x7f8] sm:$0xff] %v804
    %1325 = vst [vmem:[#allocation6 + $0x800] sm:$0xff] %v805
    %1326 = vst [vmem:[#allocation6 + $0x808] sm:$0xff] %v806
    %1327 = vst [vmem:[#allocation6 + $0x810] sm:$0xff] %v807
    %1328 = vst [vmem:[#allocation6 + $0x818] sm:$0xff] %v808
    %1329 = vst [vmem:[#allocation6 + $0x820] sm:$0xff] %v809
    %1330 = vst [vmem:[#allocation6 + $0x828] sm:$0xff] %v810
    %1331 = vst [vmem:[#allocation6 + $0x830] sm:$0xff] %v811
    %1332 = vst [vmem:[#allocation6 + $0x838] sm:$0xff] %v812
    %1333 = vst [vmem:[#allocation6 + $0x840] sm:$0xff] %v813
    %1334 = vst [vmem:[#allocation6 + $0x848] sm:$0xff] %v814
    %1335 = vst [vmem:[#allocation6 + $0x850] sm:$0xff] %v815
    %1336 = vst [vmem:[#allocation6 + $0x858] sm:$0xff] %v816
    %1337 = vst [vmem:[#allocation6 + $0x860] sm:$0xff] %v817
    %1338 = vst [vmem:[#allocation6 + $0x868] sm:$0xff] %v818
    %1339 = vst [vmem:[#allocation6 + $0x870] sm:$0xff] %v819
    %1340 = vst [vmem:[#allocation6 + $0x878] sm:$0xff] %v820
    %1341 = vst [vmem:[#allocation6 + $0x880] sm:$0xff] %v821
    %1342 = vst [vmem:[#allocation6 + $0x888] sm:$0xff] %v822
    %1343 = vst [vmem:[#allocation6 + $0x890] sm:$0xff] %v823
    %1344 = vst [vmem:[#allocation6 + $0x898] sm:$0xff] %v824
    %1345 = vst [vmem:[#allocation6 + $0x8a0] sm:$0xff] %v825
    %1346 = vst [vmem:[#allocation6 + $0x8a8] sm:$0xff] %v826
    %1347 = vst [vmem:[#allocation6 + $0x8b0] sm:$0xff] %v827
    %1348 = vst [vmem:[#allocation6 + $0x8b8] sm:$0xff] %v828
    %1349 = vst [vmem:[#allocation6 + $0x8c0] sm:$0xff] %v829
    %1350 = vst [vmem:[#allocation6 + $0x8c8] sm:$0xff] %v830
    %1351 = vst [vmem:[#allocation6 + $0x8d0] sm:$0xff] %v831
    %1352 = vst [vmem:[#allocation6 + $0x8d8] sm:$0xff] %v832
    %1353 = vst [vmem:[#allocation6 + $0x8e0] sm:$0xff] %v833
    %1354 = vst [vmem:[#allocation6 + $0x8e8] sm:$0xff] %v834
    %1355 = vst [vmem:[#allocation6 + $0x8f0] sm:$0xff] %v835
    %1356 = vst [vmem:[#allocation6 + $0x8f8] sm:$0xff] %v836
    %1357 = vst [vmem:[#allocation6 + $0x900] sm:$0xff] %v837
    %1358 = vst [vmem:[#allocation6 + $0x908] sm:$0xff] %v838
    %1359 = vst [vmem:[#allocation6 + $0x910] sm:$0xff] %v839
    %1360 = vst [vmem:[#allocation6 + $0x918] sm:$0xff] %v840
    %1361 = vst [vmem:[#allocation6 + $0x920] sm:$0xff] %v841
    %1362 = vst [vmem:[#allocation6 + $0x928] sm:$0xff] %v842
    %1363 = vst [vmem:[#allocation6 + $0x930] sm:$0xff] %v843
    %1364 = vst [vmem:[#allocation6 + $0x938] sm:$0xff] %v844
    %1365 = vst [vmem:[#allocation6 + $0x940] sm:$0xff] %v845
    %1366 = vst [vmem:[#allocation6 + $0x948] sm:$0xff] %v846
    %1367 = vst [vmem:[#allocation6 + $0x950] sm:$0xff] %v847
    %1368 = vst [vmem:[#allocation6 + $0x958] sm:$0xff] %v848
    %1369 = vst [vmem:[#allocation6 + $0x960] sm:$0xff] %v849
    %1370 = vst [vmem:[#allocation6 + $0x968] sm:$0xff] %v850
    %1371 = vst [vmem:[#allocation6 + $0x970] sm:$0xff] %v851
    %1372 = vst [vmem:[#allocation6 + $0x978] sm:$0xff] %v852
    %1373 = vst [vmem:[#allocation6 + $0x980] sm:$0xff] %v853
    %1374 = vst [vmem:[#allocation6 + $0x988] sm:$0xff] %v854
    %1375 = vst [vmem:[#allocation6 + $0x990] sm:$0xff] %v855
    %1376 = vst [vmem:[#allocation6 + $0x998] sm:$0xff] %v856
    %1377 = vst [vmem:[#allocation6 + $0x9a0] sm:$0xff] %v857
    %1378 = vst [vmem:[#allocation6 + $0x9a8] sm:$0xff] %v858
    %1379 = vst [vmem:[#allocation6 + $0x9b0] sm:$0xff] %v859
    %1380 = vst [vmem:[#allocation6 + $0x9b8] sm:$0xff] %v860
    %1381 = vst [vmem:[#allocation6 + $0x9c0] sm:$0xff] %v861
    %1382 = vst [vmem:[#allocation6 + $0x9c8] sm:$0xff] %v862
    %1383 = vst [vmem:[#allocation6 + $0x9d0] sm:$0xff] %v863
    %1384 = vst [vmem:[#allocation6 + $0x9d8] sm:$0xff] %v864
    %1385 = vst [vmem:[#allocation6 + $0x9e0] sm:$0xff] %v865
    %1386 = vst [vmem:[#allocation6 + $0x9e8] sm:$0xff] %v866
    %1387 = vst [vmem:[#allocation6 + $0x9f0] sm:$0xff] %v867
    %1388 = vst [vmem:[#allocation6 + $0x9f8] sm:$0xff] %v868
    %1389 = vst [vmem:[#allocation6 + $0xa00] sm:$0xff] %v869
    %1390 = vst [vmem:[#allocation6 + $0xa08] sm:$0xff] %v870
    %1391 = vst [vmem:[#allocation6 + $0xa10] sm:$0xff] %v871
    %1392 = vst [vmem:[#allocation6 + $0xa18] sm:$0xff] %v872
    %1393 = vst [vmem:[#allocation6 + $0xa20] sm:$0xff] %v873
    %1394 = vst [vmem:[#allocation6 + $0xa28] sm:$0xff] %v874
    %1395 = vst [vmem:[#allocation6 + $0xa30] sm:$0xff] %v875
    %1396 = vst [vmem:[#allocation6 + $0xa38] sm:$0xff] %v876
    %1397 = vst [vmem:[#allocation6 + $0xa40] sm:$0xff] %v877
    %1398 = vst [vmem:[#allocation6 + $0xa48] sm:$0xff] %v878
    %1399 = vst [vmem:[#allocation6 + $0xa50] sm:$0xff] %v879
    %1400 = vst [vmem:[#allocation6 + $0xa58] sm:$0xff] %v880
    %1401 = vst [vmem:[#allocation6 + $0xa60] sm:$0xff] %v881
    %1402 = vst [vmem:[#allocation6 + $0xa68] sm:$0xff] %v882
    %1403 = vst [vmem:[#allocation6 + $0xa70] sm:$0xff] %v883
    %1404 = vst [vmem:[#allocation6 + $0xa78] sm:$0xff] %v884
    %1405 = vst [vmem:[#allocation6 + $0xa80] sm:$0xff] %v885
    %1406 = vst [vmem:[#allocation6 + $0xa88] sm:$0xff] %v886
    %1407 = vst [vmem:[#allocation6 + $0xa90] sm:$0xff] %v887
    %1408 = vst [vmem:[#allocation6 + $0xa98] sm:$0xff] %v888
    %1409 = vst [vmem:[#allocation6 + $0xaa0] sm:$0xff] %v889
    %1410 = vst [vmem:[#allocation6 + $0xaa8] sm:$0xff] %v890
    %1411 = vst [vmem:[#allocation6 + $0xab0] sm:$0xff] %v891
    %1412 = vst [vmem:[#allocation6 + $0xab8] sm:$0xff] %v892
    %1413 = vst [vmem:[#allocation6 + $0xac0] sm:$0xff] %v893
    %1414 = vst [vmem:[#allocation6 + $0xac8] sm:$0xff] %v894
    %1415 = vst [vmem:[#allocation6 + $0xad0] sm:$0xff] %v895
    %1416 = vst [vmem:[#allocation6 + $0xad8] sm:$0xff] %v896
    %1417 = vst [vmem:[#allocation6 + $0xae0] sm:$0xff] %v897
    %1418 = vst [vmem:[#allocation6 + $0xae8] sm:$0xff] %v898
    %1419 = vst [vmem:[#allocation6 + $0xaf0] sm:$0xff] %v899
    %1420 = vst [vmem:[#allocation6 + $0xaf8] sm:$0xff] %v900
    %1421 = vst [vmem:[#allocation6 + $0xb00] sm:$0xff] %v901
    %1422 = vst [vmem:[#allocation6 + $0xb08] sm:$0xff] %v902
    %1423 = vst [vmem:[#allocation6 + $0xb10] sm:$0xff] %v903
    %1424 = vst [vmem:[#allocation6 + $0xb18] sm:$0xff] %v904
    %1425 = vst [vmem:[#allocation6 + $0xb20] sm:$0xff] %v905
    %1426 = vst [vmem:[#allocation6 + $0xb28] sm:$0xff] %v906
    %1427 = vst [vmem:[#allocation6 + $0xb30] sm:$0xff] %v907
    %1428 = vst [vmem:[#allocation6 + $0xb38] sm:$0xff] %v908
    %1429 = vst [vmem:[#allocation6 + $0xb40] sm:$0xff] %v909
    %1430 = vst [vmem:[#allocation6 + $0xb48] sm:$0xff] %v910
    %1431 = vst [vmem:[#allocation6 + $0xb50] sm:$0xff] %v911
    %1432 = vst [vmem:[#allocation6 + $0xb58] sm:$0xff] %v912
    %1433 = vst [vmem:[#allocation6 + $0xb60] sm:$0xff] %v913
    %1434 = vst [vmem:[#allocation6 + $0xb68] sm:$0xff] %v914
    %1435 = vst [vmem:[#allocation6 + $0xb70] sm:$0xff] %v915
    %1436 = vst [vmem:[#allocation6 + $0xb78] sm:$0xff] %v916
    %1437 = vst [vmem:[#allocation6 + $0xb80] sm:$0xff] %v917
    %1438 = vst [vmem:[#allocation6 + $0xb88] sm:$0xff] %v918
    %1439 = vst [vmem:[#allocation6 + $0xb90] sm:$0xff] %v919
    %1440 = vst [vmem:[#allocation6 + $0xb98] sm:$0xff] %v920
    %1441 = vst [vmem:[#allocation6 + $0xba0] sm:$0xff] %v921
    %1442 = vst [vmem:[#allocation6 + $0xba8] sm:$0xff] %v922
    %1443 = vst [vmem:[#allocation6 + $0xbb0] sm:$0xff] %v923
    %1444 = vst [vmem:[#allocation6 + $0xbb8] sm:$0xff] %v924
    %1445 = vst [vmem:[#allocation6 + $0xbc0] sm:$0xff] %v925
    %1446 = vst [vmem:[#allocation6 + $0xbc8] sm:$0xff] %v926
    %1447 = vst [vmem:[#allocation6 + $0xbd0] sm:$0xff] %v927
    %1448 = vst [vmem:[#allocation6 + $0xbd8] sm:$0xff] %v928
    %1449 = vst [vmem:[#allocation6 + $0xbe0] sm:$0xff] %v929
    %1450 = vst [vmem:[#allocation6 + $0xbe8] sm:$0xff] %v930
    %1451 = vst [vmem:[#allocation6 + $0xbf0] sm:$0xff] %v931
    %1452 = vst [vmem:[#allocation6 + $0xbf8] sm:$0xff] %v932
    %1453 = vst [vmem:[#allocation6 + $0xc00] sm:$0xff] %v933
    %1454 = vst [vmem:[#allocation6 + $0xc08] sm:$0xff] %v934
    %1455 = vst [vmem:[#allocation6 + $0xc10] sm:$0xff] %v935
    %1456 = vst [vmem:[#allocation6 + $0xc18] sm:$0xff] %v936
    %1457 = vst [vmem:[#allocation6 + $0xc20] sm:$0xff] %v937
    %1458 = vst [vmem:[#allocation6 + $0xc28] sm:$0xff] %v938
    %1459 = vst [vmem:[#allocation6 + $0xc30] sm:$0xff] %v939
    %1460 = vst [vmem:[#allocation6 + $0xc38] sm:$0xff] %v940
    %1461 = vst [vmem:[#allocation6 + $0xc40] sm:$0xff] %v941
    %1462 = vst [vmem:[#allocation6 + $0xc48] sm:$0xff] %v942
    %1463 = vst [vmem:[#allocation6 + $0xc50] sm:$0xff] %v943
    %1464 = vst [vmem:[#allocation6 + $0xc58] sm:$0xff] %v944
    %1465 = vst [vmem:[#allocation6 + $0xc60] sm:$0xff] %v945
    %1466 = vst [vmem:[#allocation6 + $0xc68] sm:$0xff] %v946
    %1467 = vst [vmem:[#allocation6 + $0xc70] sm:$0xff] %v947
    %1468 = vst [vmem:[#allocation6 + $0xc78] sm:$0xff] %v948
    %1469 = vst [vmem:[#allocation6 + $0xc80] sm:$0xff] %v949
    %1470 = vst [vmem:[#allocation6 + $0xc88] sm:$0xff] %v950
    %1471 = vst [vmem:[#allocation6 + $0xc90] sm:$0xff] %v951
    %1472 = vst [vmem:[#allocation6 + $0xc98] sm:$0xff] %v952
    %1473 = vst [vmem:[#allocation6 + $0xca0] sm:$0xff] %v953
    %1474 = vst [vmem:[#allocation6 + $0xca8] sm:$0xff] %v954
    %1475 = vst [vmem:[#allocation6 + $0xcb0] sm:$0xff] %v955
    %1476 = vst [vmem:[#allocation6 + $0xcb8] sm:$0xff] %v956
    %1477 = vst [vmem:[#allocation6 + $0xcc0] sm:$0xff] %v957
    %1478 = vst [vmem:[#allocation6 + $0xcc8] sm:$0xff] %v958
    %1479 = vst [vmem:[#allocation6 + $0xcd0] sm:$0xff] %v959
    %1480 = vst [vmem:[#allocation6 + $0xcd8] sm:$0xff] %v960
    %1481 = vst [vmem:[#allocation6 + $0xce0] sm:$0xff] %v961
    %1482 = vst [vmem:[#allocation6 + $0xce8] sm:$0xff] %v962
    %1483 = vst [vmem:[#allocation6 + $0xcf0] sm:$0xff] %v963
    %1484 = vst [vmem:[#allocation6 + $0xcf8] sm:$0xff] %v964
    %1485 = vst [vmem:[#allocation6 + $0xd00] sm:$0xff] %v965
    %1486 = vst [vmem:[#allocation6 + $0xd08] sm:$0xff] %v966
    %1487 = vst [vmem:[#allocation6 + $0xd10] sm:$0xff] %v967
    %1488 = vst [vmem:[#allocation6 + $0xd18] sm:$0xff] %v968
    %1489 = vst [vmem:[#allocation6 + $0xd20] sm:$0xff] %v969
    %1490 = vst [vmem:[#allocation6 + $0xd28] sm:$0xff] %v970
    %1491 = vst [vmem:[#allocation6 + $0xd30] sm:$0xff] %v971
    %1492 = vst [vmem:[#allocation6 + $0xd38] sm:$0xff] %v972
    %1493 = vst [vmem:[#allocation6 + $0xd40] sm:$0xff] %v973
    %1494 = vst [vmem:[#allocation6 + $0xd48] sm:$0xff] %v974
    %1495 = vst [vmem:[#allocation6 + $0xd50] sm:$0xff] %v975
    %1496 = vst [vmem:[#allocation6 + $0xd58] sm:$0xff] %v976
    %1497 = vst [vmem:[#allocation6 + $0xd60] sm:$0xff] %v977
    %1498 = vst [vmem:[#allocation6 + $0xd68] sm:$0xff] %v978
    %1499 = vst [vmem:[#allocation6 + $0xd70] sm:$0xff] %v979
    %1500 = vst [vmem:[#allocation6 + $0xd78] sm:$0xff] %v980
    %1501 = vst [vmem:[#allocation6 + $0xd80] sm:$0xff] %v981
    %1502 = vst [vmem:[#allocation6 + $0xd88] sm:$0xff] %v982
    %1503 = vst [vmem:[#allocation6 + $0xd90] sm:$0xff] %v983
    %1504 = vst [vmem:[#allocation6 + $0xd98] sm:$0xff] %v984
    %1505 = vst [vmem:[#allocation6 + $0xda0] sm:$0xff] %v985
    %1506 = vst [vmem:[#allocation6 + $0xda8] sm:$0xff] %v986
    %1507 = vst [vmem:[#allocation6 + $0xdb0] sm:$0xff] %v987
    %1508 = vst [vmem:[#allocation6 + $0xdb8] sm:$0xff] %v988
    %1509 = vst [vmem:[#allocation6 + $0xdc0] sm:$0xff] %v989
    %1510 = vst [vmem:[#allocation6 + $0xdc8] sm:$0xff] %v990
    %1511 = vst [vmem:[#allocation6 + $0xdd0] sm:$0xff] %v991
    %1512 = vst [vmem:[#allocation6 + $0xdd8] sm:$0xff] %v992
    %1513 = vst [vmem:[#allocation6 + $0xde0] sm:$0xff] %v993
    %1514 = vst [vmem:[#allocation6 + $0xde8] sm:$0xff] %v994
    %1515 = vst [vmem:[#allocation6 + $0xdf0] sm:$0xff] %v995
    %1516 = vst [vmem:[#allocation6 + $0xdf8] sm:$0xff] %v996
    %1517 = vst [vmem:[#allocation6 + $0xe00] sm:$0xff] %v997
    %1518 = vst [vmem:[#allocation6 + $0xe08] sm:$0xff] %v998
    %1519 = vst [vmem:[#allocation6 + $0xe10] sm:$0xff] %v999
    %1520 = vst [vmem:[#allocation6 + $0xe18] sm:$0xff] %v1000
    %1521 = vst [vmem:[#allocation6 + $0xe20] sm:$0xff] %v1001
    %1522 = vst [vmem:[#allocation6 + $0xe28] sm:$0xff] %v1002
    %1523 = vst [vmem:[#allocation6 + $0xe30] sm:$0xff] %v1003
    %1524 = vst [vmem:[#allocation6 + $0xe38] sm:$0xff] %v1004
    %1525 = vst [vmem:[#allocation6 + $0xe40] sm:$0xff] %v1005
    %1526 = vst [vmem:[#allocation6 + $0xe48] sm:$0xff] %v1006
    %1527 = vst [vmem:[#allocation6 + $0xe50] sm:$0xff] %v1007
    %1528 = vst [vmem:[#allocation6 + $0xe58] sm:$0xff] %v1008
    %1529 = vst [vmem:[#allocation6 + $0xe60] sm:$0xff] %v1009
    %1530 = vst [vmem:[#allocation6 + $0xe68] sm:$0xff] %v1010
    %1531 = vst [vmem:[#allocation6 + $0xe70] sm:$0xff] %v1011
    %1532 = vst [vmem:[#allocation6 + $0xe78] sm:$0xff] %v1012
    %1533 = vst [vmem:[#allocation6 + $0xe80] sm:$0xff] %v1013
    %1534 = vst [vmem:[#allocation6 + $0xe88] sm:$0xff] %v1014
    %1535 = vst [vmem:[#allocation6 + $0xe90] sm:$0xff] %v1015
    %1536 = vst [vmem:[#allocation6 + $0xe98] sm:$0xff] %v1016
    %1537 = vst [vmem:[#allocation6 + $0xea0] sm:$0xff] %v1017
    %1538 = vst [vmem:[#allocation6 + $0xea8] sm:$0xff] %v1018
    %1539 = vst [vmem:[#allocation6 + $0xeb0] sm:$0xff] %v1019
    %1540 = vst [vmem:[#allocation6 + $0xeb8] sm:$0xff] %v1020
    %1541 = vst [vmem:[#allocation6 + $0xec0] sm:$0xff] %v1021
    %1542 = vst [vmem:[#allocation6 + $0xec8] sm:$0xff] %v1022
    %1543 = vst [vmem:[#allocation6 + $0xed0] sm:$0xff] %v1023
    %1544 = vst [vmem:[#allocation6 + $0xed8] sm:$0xff] %v1024
    %1545 = vst [vmem:[#allocation6 + $0xee0] sm:$0xff] %v1025
    %1546 = vst [vmem:[#allocation6 + $0xee8] sm:$0xff] %v1026
    %1547 = vst [vmem:[#allocation6 + $0xef0] sm:$0xff] %v1027
    %1548 = vst [vmem:[#allocation6 + $0xef8] sm:$0xff] %v1028
    %1549 = vst [vmem:[#allocation6 + $0xf00] sm:$0xff] %v1029
    %1550 = vst [vmem:[#allocation6 + $0xf08] sm:$0xff] %v1030
    %1551 = vst [vmem:[#allocation6 + $0xf10] sm:$0xff] %v1031
    %1552 = vst [vmem:[#allocation6 + $0xf18] sm:$0xff] %v1032
    %1553 = vst [vmem:[#allocation6 + $0xf20] sm:$0xff] %v1033
    %1554 = vst [vmem:[#allocation6 + $0xf28] sm:$0xff] %v1034
    %1555 = vst [vmem:[#allocation6 + $0xf30] sm:$0xff] %v1035
    %1556 = vst [vmem:[#allocation6 + $0xf38] sm:$0xff] %v1036
    %1557 = vst [vmem:[#allocation6 + $0xf40] sm:$0xff] %v1037
    %1558 = vst [vmem:[#allocation6 + $0xf48] sm:$0xff] %v1038
    %1559 = vst [vmem:[#allocation6 + $0xf50] sm:$0xff] %v1039
    %1560 = vst [vmem:[#allocation6 + $0xf58] sm:$0xff] %v1040
    %1561 = vst [vmem:[#allocation6 + $0xf60] sm:$0xff] %v1041
    %1562 = vst [vmem:[#allocation6 + $0xf68] sm:$0xff] %v1042
    %1563 = vst [vmem:[#allocation6 + $0xf70] sm:$0xff] %v1043
    %1564 = vst [vmem:[#allocation6 + $0xf78] sm:$0xff] %v1044
    %1565 = vst [vmem:[#allocation6 + $0xf80] sm:$0xff] %v1045
    %1566 = vst [vmem:[#allocation6 + $0xf88] sm:$0xff] %v1046
    %1567 = vst [vmem:[#allocation6 + $0xf90] sm:$0xff] %v1047
    %1568 = vst [vmem:[#allocation6 + $0xf98] sm:$0xff] %v1048
    %1569 = vst [vmem:[#allocation6 + $0xfa0] sm:$0xff] %v1049
    %1570 = vst [vmem:[#allocation6 + $0xfa8] sm:$0xff] %v1050
    %1571 = vst [vmem:[#allocation6 + $0xfb0] sm:$0xff] %v1051
    %1572 = vst [vmem:[#allocation6 + $0xfb8] sm:$0xff] %v1052
    %1573 = vst [vmem:[#allocation6 + $0xfc0] sm:$0xff] %v1053
    %1574 = vst [vmem:[#allocation6 + $0xfc8] sm:$0xff] %v1054
    %1575 = vst [vmem:[#allocation6 + $0xfd0] sm:$0xff] %v1055
    %1576 = vst [vmem:[#allocation6 + $0xfd8] sm:$0xff] %v1056
    %1577 = vst [vmem:[#allocation6 + $0xfe0] sm:$0xff] %v1057
    %1578 = vst [vmem:[#allocation6 + $0xfe8] sm:$0xff] %v1058
    %1579 = vst [vmem:[#allocation6 + $0xff0] sm:$0xff] %v1059
    %1580 = vst [vmem:[#allocation6 + $0xff8] sm:$0xff] %v1060
    %1581 = vst [vmem:[#allocation6 + $0x1000] sm:$0xff] %v1061
    %1582 = vst [vmem:[#allocation6 + $0x1008] sm:$0xff] %v1062
    %1583 = vst [vmem:[#allocation6 + $0x1010] sm:$0xff] %v1063
    %1584 = vst [vmem:[#allocation6 + $0x1018] sm:$0xff] %v1064
    %1585 = vst [vmem:[#allocation6 + $0x1020] sm:$0xff] %v1065
    %1586 = vst [vmem:[#allocation6 + $0x1028] sm:$0xff] %v1066
    %1587 = vst [vmem:[#allocation6 + $0x1030] sm:$0xff] %v1067
    %1588 = vst [vmem:[#allocation6 + $0x1038] sm:$0xff] %v1068
    // Predicated region
    $region14: #{tpu_custom_call.1} parent=1 // pred_check
      _
    $region15: #{tpu_custom_call.1} parent=1 // pred_check_branch
      %1590 = sbr.rel (0) target = $region17
    $region16: #{tpu_custom_call.1} parent=1 // pred_region
      %s1592 = ssub.s32 66560, 66560
      %1593 = vsyncadd [#allocation5], %s1592
      %s1594 = sshll.u32 [#allocation6], 4
      %s1595 = int_to_ptr.vmem [resolvable:$true] %s1594
      %1600 = dma.vmem_to_hbm [thread:$0]  %s1595, 66560, %s2, [#allocation5], 512, 512, 32
    $region17: #{tpu_custom_call.1} parent=1 // pred_fallthru
      _
    // Predicated region
    $region18: #{tpu_custom_call.1} parent=1 // pred_check
      _
    $region19: #{tpu_custom_call.1} parent=1 // pred_check_branch
      %1602 = sbr.rel (0) target = $region21
    $region20: #{tpu_custom_call.1} parent=1 // pred_region
      %1603 = dma.done [#allocation5], 66560
    $region21: #{tpu_custom_call.1} parent=1 // pred_fallthru
      _
    %1604 = vsyncpa [#allocation4], 1
    %1605 = vsyncpa [#allocation5], 1

</llo_original>
